<compile_context>
chip_gen: v5e
topology: v5e:2x2
jax: 0.10.0
libtpu: 0.0.40
codegen_flags: <defaults>
</compile_context>

<pallas_src>
import jax
import jax.numpy as jnp
from jax.experimental import pallas as pl
from jax.experimental.pallas import tpu as pltpu


def _round_up(x, m):
    return ((x + m - 1) // m) * m


def _finephysnet_kernel(x_ref, w_ref, moff_ref, sc_ref, out_ref):
    """One batch tile per grid step.

    x_ref   : (Bt, C, S)   f32 VMEM  input sequences, NCW (S on lanes)
    w_ref   : (K, Mp, C)   f32 VMEM  PWM, motifs padded to a multiple of 8
    moff_ref: (Mp, 1)      f32 VMEM  motif offset (-inf in padded motif rows)
    sc_ref  : (2,)         f32 SMEM  [softplus(scale_unc), offset]
    out_ref : (Bt, 1)      f32 VMEM  affin * scale + offset
    """
    Bt, C, S = x_ref.shape
    K, Mp, _ = w_ref.shape
    L = S - K + 1

    # Conv accumulated as K lane-shifted batched matmuls (no full im2col copy):
    #   z[b, m, p] = sum_{j, c} pwm[m, c, j] * x[b, c, p + j]
    z = None
    for j in range(K):                                       # K is small & static
        xj = x_ref[:, :, pl.ds(j, L)]                        # (Bt, C, L) lane slice
        wj = jnp.broadcast_to(w_ref[j], (Bt, Mp, C))         # tiny: Bt*Mp*C floats
        cj = jnp.einsum("bmc,bcl->bml", wj, xj,
                        preferred_element_type=jnp.float32)  # (Bt, Mp, L)
        z = cj if z is None else z + cj

    # motif offset; padded motif rows are -inf so exp == 0 and the lse is exact
    z = z + moff_ref[...][None, :, :]                        # (Bt, Mp, L)

    # logsumexp over (motifs, positions) per batch row; M on sublanes, L on lanes
    m_b = jnp.max(jnp.max(z, axis=2, keepdims=True), axis=1, keepdims=True)  # (Bt,1,1)
    s_b = jnp.sum(jnp.sum(jnp.exp(z - m_b), axis=2, keepdims=True),
                  axis=1, keepdims=True)                                     # (Bt,1,1)
    lse = jnp.log(s_b) + m_b                                                 # (Bt,1,1)

    scale = sc_ref[0]                                        # scalars from SMEM
    offs = sc_ref[1]
    out_ref[...] = lse[:, 0, :] * scale + offs               # one (Bt, 1) store/step


def _choose_batch_tile(B, S, L, vmem_budget_bytes=16 * 1024 * 1024):
    """Largest multiple-of-8 batch tile fitting the VMEM budget, capped so the
    parallel batch grid has at least 2 steps (keeps both v7x cores busy)."""
    s_pad = _round_up(S, 128)
    l_pad = _round_up(L, 128)
    # per batch row (f32, sublane/lane padded):
    #   x block (8 x s_pad), double-buffered  +  ~3 x (8 x l_pad) for z / exp / slice
    per_row = 4 * 8 * (2 * s_pad + 3 * l_pad)
    bt = max(8, (vmem_budget_bytes // per_row) // 8 * 8)
    bt = min(bt, 512)
    # cap at ~half the batch (rounded to 8) so there are >= 2 grid steps
    bt = min(bt, max(8, _round_up(-(-B // 2), 8)))
    return int(bt)


def finephysnet_forward(x_ncw, pwm, motif_offset, scale_unc, offset):
    """x_ncw: (B, 4, S) like nn.Conv1d input; pwm: (M, 4, K). Returns (B,)."""
    x_ncw = jnp.asarray(x_ncw, jnp.float32)
    pwm = jnp.asarray(pwm, jnp.float32)
    B, C, S = x_ncw.shape
    M, C2, K = pwm.shape
    assert C == C2
    L = S - K + 1
    assert L >= 1
    Mp = _round_up(M, 8)

    Bt = _choose_batch_tile(B, S, L)
    n_tiles = max(2, -(-B // Bt))
    B_pad = n_tiles * Bt
    x_pad = jnp.pad(x_ncw, ((0, B_pad - B), (0, 0), (0, 0)))  # zero rows, sliced off

    # weights as (K, Mp, C): w[j, m, c] = pwm[m, c, j]; zero rows for padded motifs
    w = jnp.pad(jnp.transpose(pwm, (2, 0, 1)), ((0, 0), (0, Mp - M), (0, 0)))
    # -inf in padded motif rows => exp(pad) == 0 => logsumexp unchanged
    moff = jnp.full((Mp, 1), -jnp.inf, jnp.float32).at[:M, 0].set(
        jnp.asarray(motif_offset, jnp.float32))
    sc = jnp.stack([jax.nn.softplus(jnp.asarray(scale_unc, jnp.float32)),
                    jnp.asarray(offset, jnp.float32)])

    cost = pl.CostEstimate(
        flops=2 * B_pad * L * K * C * M,
        transcendentals=B_pad * L * M + B_pad,
        bytes_accessed=4 * (B_pad * C * S + K * Mp * C + Mp + B_pad),
    )

    out = pl.pallas_call(
        _finephysnet_kernel,
        out_shape=jax.ShapeDtypeStruct((B_pad, 1), jnp.float32),
        grid=(n_tiles,),
        in_specs=[
            pl.BlockSpec((Bt, C, S), lambda b: (b, 0, 0)),        # x, tiled over batch
            pl.BlockSpec((K, Mp, C), lambda b: (0, 0, 0)),        # PWM (resident)
            pl.BlockSpec((Mp, 1), lambda b: (0, 0)),              # motif offset
            pl.BlockSpec(memory_space=pltpu.MemorySpace.SMEM),    # [scale, offset]
        ],
        out_specs=pl.BlockSpec((Bt, 1), lambda b: (b, 0)),
        compiler_params=pltpu.CompilerParams(
            dimension_semantics=("parallel",),
            vmem_limit_bytes=32 * 1024 * 1024),
        cost_estimate=cost,
    )(x_pad, w, moff, sc)
    return out[:B, 0]
    # NOTE: for extremely long sequences (L >~ 20k at Bt=8) add an inner chunked
    # loop over L with a running max/sum online logsumexp to bound VMEM further.


def finephysnet_reference(x, pwm, motif_offset, scale_unc, offset):
    """Pure-JAX reference of the PyTorch forward for validation."""
    B, C, S = x.shape
    M, _, K = pwm.shape
    L = S - K + 1
    conv = jnp.zeros((B, M, L), jnp.float32)
    for j in range(K):
        conv = conv + jnp.einsum('bcl,mc->bml', x[:, :, j:j + L], pwm[:, :, j])
    conv_lin = conv + motif_offset[None, :, None]
    affin = jax.scipy.special.logsumexp(conv_lin.reshape(B, -1), axis=1)
    return affin * jax.nn.softplus(scale_unc) + offset


if __name__ == "__main__":
    key = jax.random.PRNGKey(0)
    k_pwm, k_x = jax.random.split(key)

    # Small shapes consistent with the module: known_pwm is (nMotif, 4, k).
    B, C, S = 2, 4, 16      # batch, one-hot channels, sequence length
    M, K = 8, 5             # nMotif, motif length

    known_pwm = jax.random.normal(k_pwm, (M, C, K), jnp.float32) * 0.5
    x = jax.random.normal(k_x, (B, C, S), jnp.float32)
    motif_offset = jnp.zeros((M,), jnp.float32)          # module default
    scale_unc = jnp.float32(1.0)                         # module default
    offset = jnp.float32(0.0)                            # module default

    out = finephysnet_forward(x, known_pwm, motif_offset, scale_unc, offset)
    out = jax.block_until_ready(out)

    ref = finephysnet_reference(x, known_pwm, motif_offset, scale_unc, offset)
    assert out.shape == (B,)
    assert jnp.allclose(out, ref, rtol=1e-3, atol=1e-3), (out, ref)
    print("KERNEL_OK")
</pallas_src>

<mosaic_0001>
module attributes {stable_mosaic.version = 11 : i64} {
  func.func @_finephysnet_kernel(%arg0: i32, %arg1: memref<8x4x16xf32, #tpu.memory_space<vmem>>, %arg2: memref<5x8x4xf32, #tpu.memory_space<vmem>>, %arg3: memref<8x1xf32, #tpu.memory_space<vmem>>, %arg4: memref<2xf32, #tpu.memory_space<smem>>, %arg5: memref<8x1xf32, #tpu.memory_space<vmem>>) attributes {dimension_semantics = [#tpu.dimension_semantics<parallel>], iteration_bounds = array<i64: 2>, scalar_prefetch = 0 : i64, scratch_operands = 0 : i64, tpu.core_type = #tpu.core_type<tc>, window_params = [{transform_indices = @transform_0, window_bounds = array<i64: 8, 4, 16>}, {pipeline_mode = #tpu.pipeline_mode<synchronous>, transform_indices = @transform_1, window_bounds = array<i64: 5, 8, 4>}, {pipeline_mode = #tpu.pipeline_mode<synchronous>, transform_indices = @transform_2, window_bounds = array<i64: 8, 1>}, {transform_indices = @transform_3, window_bounds = array<i64: 2>}, {transform_indices = @transform_4, window_bounds = array<i64: 8, 1>}]} {
    %c0 = arith.constant 0 : index
    %c0_0 = arith.constant 0 : index
    %c0_1 = arith.constant 0 : index
    %0 = vector.load %arg1[%c0, %c0_0, %c0_1] : memref<8x4x16xf32, #tpu.memory_space<vmem>>, vector<8x4x12xf32>
    %c0_2 = arith.constant 0 : index
    %c0_3 = arith.constant 0 : index
    %c0_4 = arith.constant 0 : index
    %1 = vector.load %arg2[%c0_2, %c0_3, %c0_4] : memref<5x8x4xf32, #tpu.memory_space<vmem>>, vector<1x8x4xf32>
    %2 = vector.shape_cast %1 : vector<1x8x4xf32> to vector<8x4xf32>
    %3 = vector.shape_cast %2 : vector<8x4xf32> to vector<1x8x4xf32>
    %4 = vector.broadcast %3 : vector<1x8x4xf32> to vector<8x8x4xf32>
    "tpu.trace_start"() <{level = 10 : i32, message = "bmc,bcl->bml"}> : () -> ()
    %cst = arith.constant dense<0.000000e+00> : vector<8x8x12xf32>
    %5 = tpu.matmul %4, %0, %cst {dimension_numbers = #tpu.dot_dimension_numbers<[2], [1], [1], [2], [0, 0, 0, 1, 1, 2], [0], [0]>} : vector<8x8x4xf32>, vector<8x4x12xf32>, vector<8x8x12xf32> -> vector<8x8x12xf32>
    "tpu.trace_stop"() : () -> ()
    %c0_5 = arith.constant 0 : index
    %c0_6 = arith.constant 0 : index
    %c1 = arith.constant 1 : index
    %6 = vector.load %arg1[%c0_5, %c0_6, %c1] : memref<8x4x16xf32, #tpu.memory_space<vmem>>, vector<8x4x12xf32>
    %c1_7 = arith.constant 1 : index
    %c0_8 = arith.constant 0 : index
    %c0_9 = arith.constant 0 : index
    %7 = vector.load %arg2[%c1_7, %c0_8, %c0_9] : memref<5x8x4xf32, #tpu.memory_space<vmem>>, vector<1x8x4xf32>
    %8 = vector.shape_cast %7 : vector<1x8x4xf32> to vector<8x4xf32>
    %9 = vector.shape_cast %8 : vector<8x4xf32> to vector<1x8x4xf32>
    %10 = vector.broadcast %9 : vector<1x8x4xf32> to vector<8x8x4xf32>
    "tpu.trace_start"() <{level = 10 : i32, message = "bmc,bcl->bml"}> : () -> ()
    %cst_10 = arith.constant dense<0.000000e+00> : vector<8x8x12xf32>
    %11 = tpu.matmul %10, %6, %cst_10 {dimension_numbers = #tpu.dot_dimension_numbers<[2], [1], [1], [2], [0, 0, 0, 1, 1, 2], [0], [0]>} : vector<8x8x4xf32>, vector<8x4x12xf32>, vector<8x8x12xf32> -> vector<8x8x12xf32>
    "tpu.trace_stop"() : () -> ()
    %12 = arith.addf %5, %11 : vector<8x8x12xf32>
    %c0_11 = arith.constant 0 : index
    %c0_12 = arith.constant 0 : index
    %c2 = arith.constant 2 : index
    %13 = vector.load %arg1[%c0_11, %c0_12, %c2] : memref<8x4x16xf32, #tpu.memory_space<vmem>>, vector<8x4x12xf32>
    %c2_13 = arith.constant 2 : index
    %c0_14 = arith.constant 0 : index
    %c0_15 = arith.constant 0 : index
    %14 = vector.load %arg2[%c2_13, %c0_14, %c0_15] : memref<5x8x4xf32, #tpu.memory_space<vmem>>, vector<1x8x4xf32>
    %15 = vector.shape_cast %14 : vector<1x8x4xf32> to vector<8x4xf32>
    %16 = vector.shape_cast %15 : vector<8x4xf32> to vector<1x8x4xf32>
    %17 = vector.broadcast %16 : vector<1x8x4xf32> to vector<8x8x4xf32>
    "tpu.trace_start"() <{level = 10 : i32, message = "bmc,bcl->bml"}> : () -> ()
    %cst_16 = arith.constant dense<0.000000e+00> : vector<8x8x12xf32>
    %18 = tpu.matmul %17, %13, %cst_16 {dimension_numbers = #tpu.dot_dimension_numbers<[2], [1], [1], [2], [0, 0, 0, 1, 1, 2], [0], [0]>} : vector<8x8x4xf32>, vector<8x4x12xf32>, vector<8x8x12xf32> -> vector<8x8x12xf32>
    "tpu.trace_stop"() : () -> ()
    %19 = arith.addf %12, %18 : vector<8x8x12xf32>
    %c0_17 = arith.constant 0 : index
    %c0_18 = arith.constant 0 : index
    %c3 = arith.constant 3 : index
    %20 = vector.load %arg1[%c0_17, %c0_18, %c3] : memref<8x4x16xf32, #tpu.memory_space<vmem>>, vector<8x4x12xf32>
    %c3_19 = arith.constant 3 : index
    %c0_20 = arith.constant 0 : index
    %c0_21 = arith.constant 0 : index
    %21 = vector.load %arg2[%c3_19, %c0_20, %c0_21] : memref<5x8x4xf32, #tpu.memory_space<vmem>>, vector<1x8x4xf32>
    %22 = vector.shape_cast %21 : vector<1x8x4xf32> to vector<8x4xf32>
    %23 = vector.shape_cast %22 : vector<8x4xf32> to vector<1x8x4xf32>
    %24 = vector.broadcast %23 : vector<1x8x4xf32> to vector<8x8x4xf32>
    "tpu.trace_start"() <{level = 10 : i32, message = "bmc,bcl->bml"}> : () -> ()
    %cst_22 = arith.constant dense<0.000000e+00> : vector<8x8x12xf32>
    %25 = tpu.matmul %24, %20, %cst_22 {dimension_numbers = #tpu.dot_dimension_numbers<[2], [1], [1], [2], [0, 0, 0, 1, 1, 2], [0], [0]>} : vector<8x8x4xf32>, vector<8x4x12xf32>, vector<8x8x12xf32> -> vector<8x8x12xf32>
    "tpu.trace_stop"() : () -> ()
    %26 = arith.addf %19, %25 : vector<8x8x12xf32>
    %c0_23 = arith.constant 0 : index
    %c0_24 = arith.constant 0 : index
    %c4 = arith.constant 4 : index
    %27 = vector.load %arg1[%c0_23, %c0_24, %c4] : memref<8x4x16xf32, #tpu.memory_space<vmem>>, vector<8x4x12xf32>
    %c4_25 = arith.constant 4 : index
    %c0_26 = arith.constant 0 : index
    %c0_27 = arith.constant 0 : index
    %28 = vector.load %arg2[%c4_25, %c0_26, %c0_27] : memref<5x8x4xf32, #tpu.memory_space<vmem>>, vector<1x8x4xf32>
    %29 = vector.shape_cast %28 : vector<1x8x4xf32> to vector<8x4xf32>
    %30 = vector.shape_cast %29 : vector<8x4xf32> to vector<1x8x4xf32>
    %31 = vector.broadcast %30 : vector<1x8x4xf32> to vector<8x8x4xf32>
    "tpu.trace_start"() <{level = 10 : i32, message = "bmc,bcl->bml"}> : () -> ()
    %cst_28 = arith.constant dense<0.000000e+00> : vector<8x8x12xf32>
    %32 = tpu.matmul %31, %27, %cst_28 {dimension_numbers = #tpu.dot_dimension_numbers<[2], [1], [1], [2], [0, 0, 0, 1, 1, 2], [0], [0]>} : vector<8x8x4xf32>, vector<8x4x12xf32>, vector<8x8x12xf32> -> vector<8x8x12xf32>
    "tpu.trace_stop"() : () -> ()
    %33 = arith.addf %26, %32 : vector<8x8x12xf32>
    %c0_29 = arith.constant 0 : index
    %c0_30 = arith.constant 0 : index
    %34 = vector.load %arg3[%c0_29, %c0_30] : memref<8x1xf32, #tpu.memory_space<vmem>>, vector<8x1xf32>
    %35 = vector.shape_cast %34 : vector<8x1xf32> to vector<1x8x1xf32>
    %36 = vector.broadcast %35 : vector<1x8x1xf32> to vector<8x8x12xf32>
    %37 = arith.addf %33, %36 : vector<8x8x12xf32>
    %cst_31 = arith.constant dense<0xFF800000> : vector<8x8xf32>
    %38 = vector.multi_reduction <maximumf>, %37, %cst_31 [2] : vector<8x8x12xf32> to vector<8x8xf32>
    %39 = vector.shape_cast %38 : vector<8x8xf32> to vector<8x8x1xf32>
    %cst_32 = arith.constant dense<0xFF800000> : vector<8x1xf32>
    %40 = vector.multi_reduction <maximumf>, %39, %cst_32 [1] : vector<8x8x1xf32> to vector<8x1xf32>
    %41 = vector.shape_cast %40 : vector<8x1xf32> to vector<8x1x1xf32>
    %42 = vector.broadcast %41 : vector<8x1x1xf32> to vector<8x8x12xf32>
    %43 = arith.subf %37, %42 : vector<8x8x12xf32>
    %44 = math.exp %43 : vector<8x8x12xf32>
    %cst_33 = arith.constant dense<0.000000e+00> : vector<8x8xf32>
    %45 = vector.multi_reduction <add>, %44, %cst_33 [2] : vector<8x8x12xf32> to vector<8x8xf32>
    %46 = vector.shape_cast %45 : vector<8x8xf32> to vector<8x8x1xf32>
    %cst_34 = arith.constant dense<0.000000e+00> : vector<8x1xf32>
    %47 = vector.multi_reduction <add>, %46, %cst_34 [1] : vector<8x8x1xf32> to vector<8x1xf32>
    %48 = vector.shape_cast %47 : vector<8x1xf32> to vector<8x1x1xf32>
    %49 = math.log %48 : vector<8x1x1xf32>
    %50 = arith.addf %49, %41 : vector<8x1x1xf32>
    %c0_35 = arith.constant 0 : index
    %51 = memref.load %arg4[%c0_35] : memref<2xf32, #tpu.memory_space<smem>>
    %c1_36 = arith.constant 1 : index
    %52 = memref.load %arg4[%c1_36] : memref<2xf32, #tpu.memory_space<smem>>
    %53 = vector.shape_cast %50 : vector<8x1x1xf32> to vector<8x1xf32>
    %54 = vector.broadcast %51 : f32 to vector<8x1xf32>
    %55 = arith.mulf %53, %54 : vector<8x1xf32>
    %56 = vector.broadcast %52 : f32 to vector<8x1xf32>
    %57 = arith.addf %55, %56 : vector<8x1xf32>
    %c0_37 = arith.constant 0 : index
    %c0_38 = arith.constant 0 : index
    %58 = vector.load %arg5[%c0_37, %c0_38] : memref<8x1xf32, #tpu.memory_space<vmem>>, vector<8x1xf32>
    tpu.vector_store %arg5[%c0_37, %c0_38], %57 {strides = array<i32>} : memref<8x1xf32, #tpu.memory_space<vmem>>, vector<8x1xf32>,
    return
  }
  func.func @transform_0(%arg0: i32) -> (i32, i32, i32) {
    %c0_i32 = arith.constant 0 : i32
    %c0_i32_0 = arith.constant 0 : i32
    %c0_i32_1 = arith.constant 0 : i32
    return %arg0, %c0_i32, %c0_i32_0 : i32, i32, i32
  }
  func.func @transform_1(%arg0: i32) -> (i32, i32, i32) {
    %c0_i32 = arith.constant 0 : i32
    %c0_i32_0 = arith.constant 0 : i32
    %c0_i32_1 = arith.constant 0 : i32
    %c0_i32_2 = arith.constant 0 : i32
    return %c0_i32, %c0_i32_0, %c0_i32_1 : i32, i32, i32
  }
  func.func @transform_2(%arg0: i32) -> (i32, i32) {
    %c0_i32 = arith.constant 0 : i32
    %c0_i32_0 = arith.constant 0 : i32
    %c0_i32_1 = arith.constant 0 : i32
    return %c0_i32, %c0_i32_0 : i32, i32
  }
  func.func @transform_3(%arg0: i32) -> i32 {
    %c0_i32 = arith.constant 0 : i32
    %c0_i32_0 = arith.constant 0 : i32
    return %c0_i32 : i32
  }
  func.func @transform_4(%arg0: i32) -> (i32, i32) {
    %c0_i32 = arith.constant 0 : i32
    %c0_i32_0 = arith.constant 0 : i32
    return %arg0, %c0_i32 : i32, i32
  }
}

</mosaic_0001>

<llo_original>
// kernel: tpu_custom_call.1
$region0: #{tpu_custom_call.1}
  #allocation0 [shape = 'u32[]', space=smem, size = 0x4, offset = 0x4, fixed_abs, tag = 'smem constant byte address 0x4 - core index']
  #allocation1 [shape = 'u32[72,128]{1,0:T(1,128)}', space=vmem, size = 0x9000, scoped, tag = 'internal scratch']
  %s0 = inlined_call_operand.vmem [shape: f32[16,4,16], index: 0, kind: input, shape index: {}]
  %s1 = inlined_call_operand.vmem [shape: f32[5,8,4], index: 1, kind: input, shape index: {}]
  %s2 = inlined_call_operand.vmem [shape: f32[8,1], index: 2, kind: input, shape index: {}]
  %s3 = inlined_call_operand.vmem [shape: f32[2], index: 3, kind: input, shape index: {}]
  %s4 = inlined_call_operand.vmem [shape: f32[16,1], index: 4, kind: output, shape index: {}]
  %s5 = sld [smem:[#allocation0]]
  $region53: #{tpu_custom_call.1} parent=0
    _
  %s7 = ssub.s32 1, %s5
  %s8 = scalar_select 0, %s7, %s5
  $region1: #{tpu_custom_call.1} parent=0
    #allocation2 [shape = 'u8[512]{0}', space=smem, size = 0x200, scoped, tag = 'input window, operand 3, single buffered']
    #allocation3 [shape = 's32[2]{0}', space=sflag, size = 0x8, scoped, tag = 'scoped memory for tpu_custom_call.1']
    %9 = vsyncpa [#allocation3], 0
    loop: start=0, step=1, limit=4
    $region2: #{tpu_custom_call.1} parent=1 // loop_pre_header
      _
    $region3: #{tpu_custom_call.1} parent=1 // loop_header
      %s11 = sphi 0, %s15
      %p12 = scmp.ge.s32.totalorder %s11, 4
      %s21 = sphi 0, %s23
      %s24 = sphi 0, %s21
      %s25 = sphi 0, %s24
      %s41 = sphi 0, %s25
      %s45 = sphi 0, %s45
      %s47 = sphi 0, %s45
      %s48 = sphi 0, %s47
      %s62 = sphi 0, %s48
      %s66 = sphi 0, %s66
      %s68 = sphi 0, %s66
      %s69 = sphi 0, %s68
      %s83 = sphi 0, %s69
      %s87 = sphi 0, %s87
      %s89 = sphi 0, %s87
      %s90 = sphi 0, %s89
      %s104 = sphi 0, %s90
      %s110 = sphi 0, %s112
      %s113 = sphi 0, %s110
      %s114 = sphi 0, %s113
      %s130 = sphi 0, %s114
    $region4: #{tpu_custom_call.1} parent=1 // loop_header_branch
      %14 = sbr.rel (%p12) target = $region8
    $region5: #{tpu_custom_call.1} parent=1 // loop_body
      %s16 = ssub.s32 %s11, 1
      %s17 = ssub.s32 %s11, 2
      %s18 = sadd.s32 %s11, 1
      %s19 = ssub.s32 %s11, %s18
      %p20 = scmp.eq.s32.totalorder %s19, 0
      %s22 = sadd.s32 %s21, 1
      %s23 = scalar_select %p20, %s21, %s22
      %p26 = pneg %p20
      %p27 = scmp.eq.s32.totalorder %s11, 1
      %p28 = por %p26, %p27
      %p29 = scmp.ne.s32.totalorder %s21, %s24
      %p30 = scmp.eq.s32.totalorder %s11, 0
      %p31 = por %p29, %p30
      %p32 = scmp.ne.s32.totalorder %s21, %s24
      %p33 = scmp.eq.s32.totalorder %s16, 1
      %p34 = por %p32, %p33
      %p35 = scmp.ne.s32.totalorder %s24, %s25
      %p36 = scmp.eq.s32.totalorder %s16, 0
      %p37 = por %p35, %p36
      %p38 = scmp.ne.s32.totalorder %s24, %s25
      %p39 = scmp.eq.s32.totalorder %s17, 1
      %p40 = por %p38, %p39
      %p42 = scmp.ne.s32.totalorder %s25, %s41
      %p43 = scmp.eq.s32.totalorder %s17, 0
      %p44 = por %p42, %p43
      %s46 = sadd.s32 %s45, 1
      %p49 = scmp.eq.s32.totalorder %s11, 1
      %p50 = scmp.ne.s32.totalorder %s45, %s47
      %p51 = scmp.eq.s32.totalorder %s11, 0
      %p52 = por %p50, %p51
      %p53 = scmp.ne.s32.totalorder %s45, %s47
      %p54 = scmp.eq.s32.totalorder %s16, 1
      %p55 = por %p53, %p54
      %p56 = scmp.ne.s32.totalorder %s47, %s48
      %p57 = scmp.eq.s32.totalorder %s16, 0
      %p58 = por %p56, %p57
      %p59 = scmp.ne.s32.totalorder %s47, %s48
      %p60 = scmp.eq.s32.totalorder %s17, 1
      %p61 = por %p59, %p60
      %p63 = scmp.ne.s32.totalorder %s48, %s62
      %p64 = scmp.eq.s32.totalorder %s17, 0
      %p65 = por %p63, %p64
      %s67 = sadd.s32 %s66, 1
      %p70 = scmp.eq.s32.totalorder %s11, 1
      %p71 = scmp.ne.s32.totalorder %s66, %s68
      %p72 = scmp.eq.s32.totalorder %s11, 0
      %p73 = por %p71, %p72
      %p74 = scmp.ne.s32.totalorder %s66, %s68
      %p75 = scmp.eq.s32.totalorder %s16, 1
      %p76 = por %p74, %p75
      %p77 = scmp.ne.s32.totalorder %s68, %s69
      %p78 = scmp.eq.s32.totalorder %s16, 0
      %p79 = por %p77, %p78
      %p80 = scmp.ne.s32.totalorder %s68, %s69
      %p81 = scmp.eq.s32.totalorder %s17, 1
      %p82 = por %p80, %p81
      %p84 = scmp.ne.s32.totalorder %s69, %s83
      %p85 = scmp.eq.s32.totalorder %s17, 0
      %p86 = por %p84, %p85
      %s88 = sadd.s32 %s87, 1
      %p91 = scmp.eq.s32.totalorder %s11, 1
      %p92 = scmp.ne.s32.totalorder %s87, %s89
      %p93 = scmp.eq.s32.totalorder %s11, 0
      %p94 = por %p92, %p93
      %p95 = scmp.ne.s32.totalorder %s87, %s89
      %p96 = scmp.eq.s32.totalorder %s16, 1
      %p97 = por %p95, %p96
      %p98 = scmp.ne.s32.totalorder %s89, %s90
      %p99 = scmp.eq.s32.totalorder %s16, 0
      %p100 = por %p98, %p99
      %p101 = scmp.ne.s32.totalorder %s89, %s90
      %p102 = scmp.eq.s32.totalorder %s17, 1
      %p103 = por %p101, %p102
      %p105 = scmp.ne.s32.totalorder %s90, %s104
      %p106 = scmp.eq.s32.totalorder %s17, 0
      %p107 = por %p105, %p106
      %s108 = ssub.s32 %s11, %s18
      %p109 = scmp.eq.s32.totalorder %s108, 0
      %s111 = sadd.s32 %s110, 1
      %s112 = scalar_select %p109, %s110, %s111
      %p115 = pneg %p109
      %p116 = scmp.eq.s32.totalorder %s11, 1
      %p117 = por %p115, %p116
      %p118 = scmp.ne.s32.totalorder %s110, %s113
      %p119 = scmp.eq.s32.totalorder %s11, 0
      %p120 = por %p118, %p119
      %p121 = scmp.ne.s32.totalorder %s110, %s113
      %p122 = scmp.eq.s32.totalorder %s16, 1
      %p123 = por %p121, %p122
      %p124 = scmp.ne.s32.totalorder %s113, %s114
      %p125 = scmp.eq.s32.totalorder %s16, 0
      %p126 = por %p124, %p125
      %p127 = scmp.ne.s32.totalorder %s113, %s114
      %p128 = scmp.eq.s32.totalorder %s17, 1
      %p129 = por %p127, %p128
      %p131 = scmp.ne.s32.totalorder %s114, %s130
      %p132 = scmp.eq.s32.totalorder %s17, 0
      %p133 = por %p131, %p132
      %p134 = scmp.le.s32.totalorder 1, %s11
      %p135 = scmp.lt.s32.totalorder %s11, 3
      %p136 = pnand %p134, %p135
      %p137 = pneg %p136
      // Predicated region
      $region9: #{tpu_custom_call.1} parent=5 // pred_check
        _
      $region10: #{tpu_custom_call.1} parent=5 // pred_check_branch
        %139 = sbr.rel (%p136) target = $region12
      $region11: #{tpu_custom_call.1} parent=5 // pred_region
        %s140 = ssub.s32 %s11, 1
        // Predicated region
        $region13: #{tpu_custom_call.1} parent=11 // pred_check
          %p141 = pneg %p58
        $region14: #{tpu_custom_call.1} parent=11 // pred_check_branch
          %143 = sbr.rel (%p141) target = $region16
        $region15: #{tpu_custom_call.1} parent=11 // pred_region
          _
        $region16: #{tpu_custom_call.1} parent=11 // pred_fallthru
          _
        // Predicated region
        $region17: #{tpu_custom_call.1} parent=11 // pred_check
          %p144 = pneg %p79
        $region18: #{tpu_custom_call.1} parent=11 // pred_check_branch
          %146 = sbr.rel (%p144) target = $region20
        $region19: #{tpu_custom_call.1} parent=11 // pred_region
          _
        $region20: #{tpu_custom_call.1} parent=11 // pred_fallthru
          _
        // Predicated region
        $region21: #{tpu_custom_call.1} parent=11 // pred_check
          %p147 = pneg %p100
        $region22: #{tpu_custom_call.1} parent=11 // pred_check_branch
          %149 = sbr.rel (%p147) target = $region24
        $region23: #{tpu_custom_call.1} parent=11 // pred_region
          %151 = vsyncadd [#allocation3], 0
          %s153 = sshll.u32 %s3, 4
          %s154 = int_to_ptr.vmem [resolvable:$true] %s153
          %156 = dma.vmem_to_smem %s154, 16, [#allocation2], [#allocation3]
        $region24: #{tpu_custom_call.1} parent=11 // pred_fallthru
          _
      $region12: #{tpu_custom_call.1} parent=5 // pred_fallthru
        _
      %p157 = scmp.lt.s32.totalorder %s11, 2
      // Predicated region
      $region25: #{tpu_custom_call.1} parent=5 // pred_check
        %p158 = pneg %p157
      $region26: #{tpu_custom_call.1} parent=5 // pred_check_branch
        %160 = sbr.rel (%p158) target = $region28
      $region27: #{tpu_custom_call.1} parent=5 // pred_region
        // Predicated region
        $region29: #{tpu_custom_call.1} parent=27 // pred_check
          %p161 = pneg %p31
        $region30: #{tpu_custom_call.1} parent=27 // pred_check_branch
          %163 = sbr.rel (%p161) target = $region32
        $region31: #{tpu_custom_call.1} parent=27 // pred_region
          %s164 = smul.u32 8, %s11
          %p165 = scmp.lt.s32.totalorder %s164, 15
          %s166 = scalar_select %p165, %s164, 15
          %s167 = smul.addr %s166, 4
          %s168 = scalar_lea.vmem %s0, %s167
          %s169 = smul.u32 8, %s11
        $region32: #{tpu_custom_call.1} parent=27 // pred_fallthru
          _
      $region28: #{tpu_custom_call.1} parent=5 // pred_fallthru
        _
      %p170 = scmp.le.s32.totalorder 1, %s11
      %p171 = scmp.lt.s32.totalorder %s11, 3
      %p172 = pnand %p170, %p171
      %p173 = pneg %p172
      // Predicated region
      $region33: #{tpu_custom_call.1} parent=5 // pred_check
        _
      $region34: #{tpu_custom_call.1} parent=5 // pred_check_branch
        %175 = sbr.rel (%p172) target = $region36
      $region35: #{tpu_custom_call.1} parent=5 // pred_region
        %s176 = ssub.s32 %s11, 1
        // Predicated region
        $region37: #{tpu_custom_call.1} parent=35 // pred_check
          %p177 = pneg %p100
        $region38: #{tpu_custom_call.1} parent=35 // pred_check_branch
          %179 = sbr.rel (%p177) target = $region40
        $region39: #{tpu_custom_call.1} parent=35 // pred_region
          %181 = dma.done [#allocation3], 16
        $region40: #{tpu_custom_call.1} parent=35 // pred_fallthru
          _
        %182 = sfence
        %s183 = smul.u32 8, %s16
        %p184 = scmp.lt.s32.totalorder %s183, 15
        %s185 = scalar_select %p184, %s183, 15
        %s186 = smul.addr %s185, 4
        %s187 = scalar_lea.vmem %s0, %s186
        %p188 = pneg %p37
        %p189 = pneg %p34
        %p190 = pneg %p58
        %p191 = pneg %p55
        %p192 = pneg %p79
        %p193 = pneg %p76
        %p194 = pneg %p100
        %p195 = pneg %p97
        %p196 = pneg %p126
        %p197 = pneg %p123
        %p198 = scmp.lt.s32.totalorder %s16, 1
        %s199 = scalar_select %p198, %s16, 1
        %s200 = smul.addr %s199, 8
        %s201 = scalar_lea.vmem %s4, %s200
        %s202 = smul.u32 8, %s16
        %p203 = scmp.lt.s32.totalorder %s202, 15
        %s204 = scalar_select %p203, %s202, 15
        %s205 = smul.addr %s204, 4
        %s206 = scalar_lea.vmem %s0, %s205
        %s207 = smul.u32 8, %s16
        %p208 = scmp.lt.s32.totalorder %s16, 1
        %s209 = scalar_select %p208, %s16, 1
        %s210 = smul.addr %s209, 8
        %s211 = scalar_lea.vmem %s4, %s210
        %v212 = vld [vmem:[%s206] sm:$0xf]
        %v213 = vld [vmem:[%s206 + $0x4] sm:$0xf]
        %v214 = vld [vmem:[%s206 + $0x8] sm:$0xf]
        %v215 = vld [vmem:[%s206 + $0xc] sm:$0xf]
        %v216 = vld [vmem:[%s206 + $0x10] sm:$0xf]
        %v217 = vld [vmem:[%s206 + $0x14] sm:$0xf]
        %v218 = vld [vmem:[%s206 + $0x18] sm:$0xf]
        %v219 = vld [vmem:[%s206 + $0x1c] sm:$0xf]
        %v220 = vld [vmem:[%s1] sm:$0xff]
        %v221 = vld [vmem:[%s206] sm:$0xf]
        %v222 = vld [vmem:[%s206 + $0x4] sm:$0xf]
        %v223 = vld [vmem:[%s206 + $0x8] sm:$0xf]
        %v224 = vld [vmem:[%s206 + $0xc] sm:$0xf]
        %v225 = vld [vmem:[%s206 + $0x10] sm:$0xf]
        %v226 = vld [vmem:[%s206 + $0x14] sm:$0xf]
        %v227 = vld [vmem:[%s206 + $0x18] sm:$0xf]
        %v228 = vld [vmem:[%s206 + $0x1c] sm:$0xf]
        %s229 = scalar_lea.vmem %s1, 8
        %v230 = vld [vmem:[%s229] sm:$0xff]
        %232 = vrot.lane.b32.xlu0 %v221, 127
        %v233 = vpop.permute.xlu0 %232
        %vm234 = vcmask 31744
        %v236 = vsel %vm234, %v230, 0
        %vm238 = vcmask 1043456
        %v239 = vsel %vm238, %v233, 0
        %241 = vmatpush.msra.mxu0 0.0
        %242 = vmatpush.msra.mxu0 0.0
        %243 = vmatpush.msra.mxu0 0.0
        %244 = vmatpush.msra.mxu0 0.0
        %245 = vmatpush.msra.mxu0 0.0
        %246 = vmatpush.msra.mxu0 0.0
        %247 = vmatpush.msra.mxu0 0.0
        %248 = vmatpush.msra.mxu0 0.0
        %249 = vmatpush.msra.mxu0 0.0
        %250 = vmatpush.msra.mxu0 0.0
        %251 = vmatpush.msra.mxu0 0.0
        %252 = vmatpush.msra.mxu0 0.0
        %253 = vmatpush.msra.mxu0 0.0
        %254 = vmatpush.msra.mxu0 0.0
        %255 = vmatpush.msra.mxu0 0.0
        %256 = vmatpush.msra.mxu0 %v239
        %257 = vmatmul.f32.gmra.mxu0 %v236
        %v258 = vpop.f32.mrf.mxu0
        %v259 = vadd.f32 0.0, %v258
        %260 = vdwg.mxu0
        %262 = vrot.lane.b32.xlu0 %v222, 127
        %v263 = vpop.permute.xlu0 %262
        %v264 = vsel %vm238, %v263, 0
        %266 = vmatpush.msra.mxu0 0.0
        %267 = vmatpush.msra.mxu0 0.0
        %268 = vmatpush.msra.mxu0 0.0
        %269 = vmatpush.msra.mxu0 0.0
        %270 = vmatpush.msra.mxu0 0.0
        %271 = vmatpush.msra.mxu0 0.0
        %272 = vmatpush.msra.mxu0 0.0
        %273 = vmatpush.msra.mxu0 0.0
        %274 = vmatpush.msra.mxu0 0.0
        %275 = vmatpush.msra.mxu0 0.0
        %276 = vmatpush.msra.mxu0 0.0
        %277 = vmatpush.msra.mxu0 0.0
        %278 = vmatpush.msra.mxu0 0.0
        %279 = vmatpush.msra.mxu0 0.0
        %280 = vmatpush.msra.mxu0 0.0
        %281 = vmatpush.msra.mxu0 %v264
        %282 = vmatmul.f32.gmra.mxu0 %v236
        %v283 = vpop.f32.mrf.mxu0
        %v284 = vadd.f32 0.0, %v283
        %285 = vdwg.mxu0
        %287 = vrot.lane.b32.xlu0 %v223, 127
        %v288 = vpop.permute.xlu0 %287
        %v289 = vsel %vm238, %v288, 0
        %291 = vmatpush.msra.mxu0 0.0
        %292 = vmatpush.msra.mxu0 0.0
        %293 = vmatpush.msra.mxu0 0.0
        %294 = vmatpush.msra.mxu0 0.0
        %295 = vmatpush.msra.mxu0 0.0
        %296 = vmatpush.msra.mxu0 0.0
        %297 = vmatpush.msra.mxu0 0.0
        %298 = vmatpush.msra.mxu0 0.0
        %299 = vmatpush.msra.mxu0 0.0
        %300 = vmatpush.msra.mxu0 0.0
        %301 = vmatpush.msra.mxu0 0.0
        %302 = vmatpush.msra.mxu0 0.0
        %303 = vmatpush.msra.mxu0 0.0
        %304 = vmatpush.msra.mxu0 0.0
        %305 = vmatpush.msra.mxu0 0.0
        %306 = vmatpush.msra.mxu0 %v289
        %307 = vmatmul.f32.gmra.mxu0 %v236
        %v308 = vpop.f32.mrf.mxu0
        %v309 = vadd.f32 0.0, %v308
        %310 = vdwg.mxu0
        %312 = vrot.lane.b32.xlu0 %v224, 127
        %v313 = vpop.permute.xlu0 %312
        %v314 = vsel %vm238, %v313, 0
        %316 = vmatpush.msra.mxu0 0.0
        %317 = vmatpush.msra.mxu0 0.0
        %318 = vmatpush.msra.mxu0 0.0
        %319 = vmatpush.msra.mxu0 0.0
        %320 = vmatpush.msra.mxu0 0.0
        %321 = vmatpush.msra.mxu0 0.0
        %322 = vmatpush.msra.mxu0 0.0
        %323 = vmatpush.msra.mxu0 0.0
        %324 = vmatpush.msra.mxu0 0.0
        %325 = vmatpush.msra.mxu0 0.0
        %326 = vmatpush.msra.mxu0 0.0
        %327 = vmatpush.msra.mxu0 0.0
        %328 = vmatpush.msra.mxu0 0.0
        %329 = vmatpush.msra.mxu0 0.0
        %330 = vmatpush.msra.mxu0 0.0
        %331 = vmatpush.msra.mxu0 %v314
        %332 = vmatmul.f32.gmra.mxu0 %v236
        %v333 = vpop.f32.mrf.mxu0
        %v334 = vadd.f32 0.0, %v333
        %335 = vdwg.mxu0
        %337 = vrot.lane.b32.xlu0 %v225, 127
        %v338 = vpop.permute.xlu0 %337
        %v339 = vsel %vm238, %v338, 0
        %341 = vmatpush.msra.mxu0 0.0
        %342 = vmatpush.msra.mxu0 0.0
        %343 = vmatpush.msra.mxu0 0.0
        %344 = vmatpush.msra.mxu0 0.0
        %345 = vmatpush.msra.mxu0 0.0
        %346 = vmatpush.msra.mxu0 0.0
        %347 = vmatpush.msra.mxu0 0.0
        %348 = vmatpush.msra.mxu0 0.0
        %349 = vmatpush.msra.mxu0 0.0
        %350 = vmatpush.msra.mxu0 0.0
        %351 = vmatpush.msra.mxu0 0.0
        %352 = vmatpush.msra.mxu0 0.0
        %353 = vmatpush.msra.mxu0 0.0
        %354 = vmatpush.msra.mxu0 0.0
        %355 = vmatpush.msra.mxu0 0.0
        %356 = vmatpush.msra.mxu0 %v339
        %357 = vmatmul.f32.gmra.mxu0 %v236
        %v358 = vpop.f32.mrf.mxu0
        %v359 = vadd.f32 0.0, %v358
        %360 = vdwg.mxu0
        %362 = vrot.lane.b32.xlu0 %v226, 127
        %v363 = vpop.permute.xlu0 %362
        %v364 = vsel %vm238, %v363, 0
        %366 = vmatpush.msra.mxu0 0.0
        %367 = vmatpush.msra.mxu0 0.0
        %368 = vmatpush.msra.mxu0 0.0
        %369 = vmatpush.msra.mxu0 0.0
        %370 = vmatpush.msra.mxu0 0.0
        %371 = vmatpush.msra.mxu0 0.0
        %372 = vmatpush.msra.mxu0 0.0
        %373 = vmatpush.msra.mxu0 0.0
        %374 = vmatpush.msra.mxu0 0.0
        %375 = vmatpush.msra.mxu0 0.0
        %376 = vmatpush.msra.mxu0 0.0
        %377 = vmatpush.msra.mxu0 0.0
        %378 = vmatpush.msra.mxu0 0.0
        %379 = vmatpush.msra.mxu0 0.0
        %380 = vmatpush.msra.mxu0 0.0
        %381 = vmatpush.msra.mxu0 %v364
        %382 = vmatmul.f32.gmra.mxu0 %v236
        %v383 = vpop.f32.mrf.mxu0
        %v384 = vadd.f32 0.0, %v383
        %385 = vdwg.mxu0
        %387 = vrot.lane.b32.xlu0 %v227, 127
        %v388 = vpop.permute.xlu0 %387
        %v389 = vsel %vm238, %v388, 0
        %391 = vmatpush.msra.mxu0 0.0
        %392 = vmatpush.msra.mxu0 0.0
        %393 = vmatpush.msra.mxu0 0.0
        %394 = vmatpush.msra.mxu0 0.0
        %395 = vmatpush.msra.mxu0 0.0
        %396 = vmatpush.msra.mxu0 0.0
        %397 = vmatpush.msra.mxu0 0.0
        %398 = vmatpush.msra.mxu0 0.0
        %399 = vmatpush.msra.mxu0 0.0
        %400 = vmatpush.msra.mxu0 0.0
        %401 = vmatpush.msra.mxu0 0.0
        %402 = vmatpush.msra.mxu0 0.0
        %403 = vmatpush.msra.mxu0 0.0
        %404 = vmatpush.msra.mxu0 0.0
        %405 = vmatpush.msra.mxu0 0.0
        %406 = vmatpush.msra.mxu0 %v389
        %407 = vmatmul.f32.gmra.mxu0 %v236
        %v408 = vpop.f32.mrf.mxu0
        %v409 = vadd.f32 0.0, %v408
        %410 = vdwg.mxu0
        %412 = vrot.lane.b32.xlu0 %v228, 127
        %v413 = vpop.permute.xlu0 %412
        %v414 = vsel %vm238, %v413, 0
        %416 = vmatpush.msra.mxu0 0.0
        %417 = vmatpush.msra.mxu0 0.0
        %418 = vmatpush.msra.mxu0 0.0
        %419 = vmatpush.msra.mxu0 0.0
        %420 = vmatpush.msra.mxu0 0.0
        %421 = vmatpush.msra.mxu0 0.0
        %422 = vmatpush.msra.mxu0 0.0
        %423 = vmatpush.msra.mxu0 0.0
        %424 = vmatpush.msra.mxu0 0.0
        %425 = vmatpush.msra.mxu0 0.0
        %426 = vmatpush.msra.mxu0 0.0
        %427 = vmatpush.msra.mxu0 0.0
        %428 = vmatpush.msra.mxu0 0.0
        %429 = vmatpush.msra.mxu0 0.0
        %430 = vmatpush.msra.mxu0 0.0
        %431 = vmatpush.msra.mxu0 %v414
        %432 = vmatmul.f32.gmra.mxu0 %v236
        %v433 = vpop.f32.mrf.mxu0
        %v434 = vadd.f32 0.0, %v433
        %435 = vdwg.mxu0
        %v437 = vsel %vm234, %v220, 0
        %v440 = vsel %vm238, %v212, 0
        %442 = vmatpush.msra.mxu0 0.0
        %443 = vmatpush.msra.mxu0 0.0
        %444 = vmatpush.msra.mxu0 0.0
        %445 = vmatpush.msra.mxu0 0.0
        %446 = vmatpush.msra.mxu0 0.0
        %447 = vmatpush.msra.mxu0 0.0
        %448 = vmatpush.msra.mxu0 0.0
        %449 = vmatpush.msra.mxu0 0.0
        %450 = vmatpush.msra.mxu0 0.0
        %451 = vmatpush.msra.mxu0 0.0
        %452 = vmatpush.msra.mxu0 0.0
        %453 = vmatpush.msra.mxu0 0.0
        %454 = vmatpush.msra.mxu0 0.0
        %455 = vmatpush.msra.mxu0 0.0
        %456 = vmatpush.msra.mxu0 0.0
        %457 = vmatpush.msra.mxu0 %v440
        %458 = vmatmul.f32.gmra.mxu0 %v437
        %v459 = vpop.f32.mrf.mxu0
        %v460 = vadd.f32 %v259, %v459
        %461 = vdwg.mxu0
        %v463 = vsel %vm238, %v213, 0
        %465 = vmatpush.msra.mxu0 0.0
        %466 = vmatpush.msra.mxu0 0.0
        %467 = vmatpush.msra.mxu0 0.0
        %468 = vmatpush.msra.mxu0 0.0
        %469 = vmatpush.msra.mxu0 0.0
        %470 = vmatpush.msra.mxu0 0.0
        %471 = vmatpush.msra.mxu0 0.0
        %472 = vmatpush.msra.mxu0 0.0
        %473 = vmatpush.msra.mxu0 0.0
        %474 = vmatpush.msra.mxu0 0.0
        %475 = vmatpush.msra.mxu0 0.0
        %476 = vmatpush.msra.mxu0 0.0
        %477 = vmatpush.msra.mxu0 0.0
        %478 = vmatpush.msra.mxu0 0.0
        %479 = vmatpush.msra.mxu0 0.0
        %480 = vmatpush.msra.mxu0 %v463
        %481 = vmatmul.f32.gmra.mxu0 %v437
        %v482 = vpop.f32.mrf.mxu0
        %v483 = vadd.f32 %v284, %v482
        %484 = vdwg.mxu0
        %v486 = vsel %vm238, %v214, 0
        %488 = vmatpush.msra.mxu0 0.0
        %489 = vmatpush.msra.mxu0 0.0
        %490 = vmatpush.msra.mxu0 0.0
        %491 = vmatpush.msra.mxu0 0.0
        %492 = vmatpush.msra.mxu0 0.0
        %493 = vmatpush.msra.mxu0 0.0
        %494 = vmatpush.msra.mxu0 0.0
        %495 = vmatpush.msra.mxu0 0.0
        %496 = vmatpush.msra.mxu0 0.0
        %497 = vmatpush.msra.mxu0 0.0
        %498 = vmatpush.msra.mxu0 0.0
        %499 = vmatpush.msra.mxu0 0.0
        %500 = vmatpush.msra.mxu0 0.0
        %501 = vmatpush.msra.mxu0 0.0
        %502 = vmatpush.msra.mxu0 0.0
        %503 = vmatpush.msra.mxu0 %v486
        %504 = vmatmul.f32.gmra.mxu0 %v437
        %v505 = vpop.f32.mrf.mxu0
        %v506 = vadd.f32 %v309, %v505
        %507 = vdwg.mxu0
        %v509 = vsel %vm238, %v215, 0
        %511 = vmatpush.msra.mxu0 0.0
        %512 = vmatpush.msra.mxu0 0.0
        %513 = vmatpush.msra.mxu0 0.0
        %514 = vmatpush.msra.mxu0 0.0
        %515 = vmatpush.msra.mxu0 0.0
        %516 = vmatpush.msra.mxu0 0.0
        %517 = vmatpush.msra.mxu0 0.0
        %518 = vmatpush.msra.mxu0 0.0
        %519 = vmatpush.msra.mxu0 0.0
        %520 = vmatpush.msra.mxu0 0.0
        %521 = vmatpush.msra.mxu0 0.0
        %522 = vmatpush.msra.mxu0 0.0
        %523 = vmatpush.msra.mxu0 0.0
        %524 = vmatpush.msra.mxu0 0.0
        %525 = vmatpush.msra.mxu0 0.0
        %526 = vmatpush.msra.mxu0 %v509
        %527 = vmatmul.f32.gmra.mxu0 %v437
        %v528 = vpop.f32.mrf.mxu0
        %v529 = vadd.f32 %v334, %v528
        %530 = vdwg.mxu0
        %v532 = vsel %vm238, %v216, 0
        %534 = vmatpush.msra.mxu0 0.0
        %535 = vmatpush.msra.mxu0 0.0
        %536 = vmatpush.msra.mxu0 0.0
        %537 = vmatpush.msra.mxu0 0.0
        %538 = vmatpush.msra.mxu0 0.0
        %539 = vmatpush.msra.mxu0 0.0
        %540 = vmatpush.msra.mxu0 0.0
        %541 = vmatpush.msra.mxu0 0.0
        %542 = vmatpush.msra.mxu0 0.0
        %543 = vmatpush.msra.mxu0 0.0
        %544 = vmatpush.msra.mxu0 0.0
        %545 = vmatpush.msra.mxu0 0.0
        %546 = vmatpush.msra.mxu0 0.0
        %547 = vmatpush.msra.mxu0 0.0
        %548 = vmatpush.msra.mxu0 0.0
        %549 = vmatpush.msra.mxu0 %v532
        %550 = vmatmul.f32.gmra.mxu0 %v437
        %v551 = vpop.f32.mrf.mxu0
        %v552 = vadd.f32 %v359, %v551
        %553 = vdwg.mxu0
        %v555 = vsel %vm238, %v217, 0
        %557 = vmatpush.msra.mxu0 0.0
        %558 = vmatpush.msra.mxu0 0.0
        %559 = vmatpush.msra.mxu0 0.0
        %560 = vmatpush.msra.mxu0 0.0
        %561 = vmatpush.msra.mxu0 0.0
        %562 = vmatpush.msra.mxu0 0.0
        %563 = vmatpush.msra.mxu0 0.0
        %564 = vmatpush.msra.mxu0 0.0
        %565 = vmatpush.msra.mxu0 0.0
        %566 = vmatpush.msra.mxu0 0.0
        %567 = vmatpush.msra.mxu0 0.0
        %568 = vmatpush.msra.mxu0 0.0
        %569 = vmatpush.msra.mxu0 0.0
        %570 = vmatpush.msra.mxu0 0.0
        %571 = vmatpush.msra.mxu0 0.0
        %572 = vmatpush.msra.mxu0 %v555
        %573 = vmatmul.f32.gmra.mxu0 %v437
        %v574 = vpop.f32.mrf.mxu0
        %v575 = vadd.f32 %v384, %v574
        %576 = vdwg.mxu0
        %v578 = vsel %vm238, %v218, 0
        %580 = vmatpush.msra.mxu0 0.0
        %581 = vmatpush.msra.mxu0 0.0
        %582 = vmatpush.msra.mxu0 0.0
        %583 = vmatpush.msra.mxu0 0.0
        %584 = vmatpush.msra.mxu0 0.0
        %585 = vmatpush.msra.mxu0 0.0
        %586 = vmatpush.msra.mxu0 0.0
        %587 = vmatpush.msra.mxu0 0.0
        %588 = vmatpush.msra.mxu0 0.0
        %589 = vmatpush.msra.mxu0 0.0
        %590 = vmatpush.msra.mxu0 0.0
        %591 = vmatpush.msra.mxu0 0.0
        %592 = vmatpush.msra.mxu0 0.0
        %593 = vmatpush.msra.mxu0 0.0
        %594 = vmatpush.msra.mxu0 0.0
        %595 = vmatpush.msra.mxu0 %v578
        %596 = vmatmul.f32.gmra.mxu0 %v437
        %v597 = vpop.f32.mrf.mxu0
        %v598 = vadd.f32 %v409, %v597
        %599 = vdwg.mxu0
        %v601 = vsel %vm238, %v219, 0
        %603 = vmatpush.msra.mxu0 0.0
        %604 = vmatpush.msra.mxu0 0.0
        %605 = vmatpush.msra.mxu0 0.0
        %606 = vmatpush.msra.mxu0 0.0
        %607 = vmatpush.msra.mxu0 0.0
        %608 = vmatpush.msra.mxu0 0.0
        %609 = vmatpush.msra.mxu0 0.0
        %610 = vmatpush.msra.mxu0 0.0
        %611 = vmatpush.msra.mxu0 0.0
        %612 = vmatpush.msra.mxu0 0.0
        %613 = vmatpush.msra.mxu0 0.0
        %614 = vmatpush.msra.mxu0 0.0
        %615 = vmatpush.msra.mxu0 0.0
        %616 = vmatpush.msra.mxu0 0.0
        %617 = vmatpush.msra.mxu0 0.0
        %618 = vmatpush.msra.mxu0 %v601
        %619 = vmatmul.f32.gmra.mxu0 %v437
        %v620 = vpop.f32.mrf.mxu0
        %v621 = vadd.f32 %v434, %v620
        %622 = vdwg.mxu0
        %v623 = vld [vmem:[%s206] sm:$0xf]
        %v624 = vld [vmem:[%s206 + $0x4] sm:$0xf]
        %v625 = vld [vmem:[%s206 + $0x8] sm:$0xf]
        %v626 = vld [vmem:[%s206 + $0xc] sm:$0xf]
        %v627 = vld [vmem:[%s206 + $0x10] sm:$0xf]
        %v628 = vld [vmem:[%s206 + $0x14] sm:$0xf]
        %v629 = vld [vmem:[%s206 + $0x18] sm:$0xf]
        %v630 = vld [vmem:[%s206 + $0x1c] sm:$0xf]
        %s631 = scalar_lea.vmem %s1, 16
        %v632 = vld [vmem:[%s631] sm:$0xff]
        %634 = vrot.lane.b32.xlu0 %v623, 126
        %v635 = vpop.permute.xlu0 %634
        %v637 = vsel %vm234, %v632, 0
        %v639 = vsel %vm238, %v635, 0
        %641 = vmatpush.msra.mxu0 0.0
        %642 = vmatpush.msra.mxu0 0.0
        %643 = vmatpush.msra.mxu0 0.0
        %644 = vmatpush.msra.mxu0 0.0
        %645 = vmatpush.msra.mxu0 0.0
        %646 = vmatpush.msra.mxu0 0.0
        %647 = vmatpush.msra.mxu0 0.0
        %648 = vmatpush.msra.mxu0 0.0
        %649 = vmatpush.msra.mxu0 0.0
        %650 = vmatpush.msra.mxu0 0.0
        %651 = vmatpush.msra.mxu0 0.0
        %652 = vmatpush.msra.mxu0 0.0
        %653 = vmatpush.msra.mxu0 0.0
        %654 = vmatpush.msra.mxu0 0.0
        %655 = vmatpush.msra.mxu0 0.0
        %656 = vmatpush.msra.mxu0 %v639
        %657 = vmatmul.f32.gmra.mxu0 %v637
        %v658 = vpop.f32.mrf.mxu0
        %v659 = vadd.f32 0.0, %v658
        %660 = vdwg.mxu0
        %662 = vrot.lane.b32.xlu0 %v624, 126
        %v663 = vpop.permute.xlu0 %662
        %v664 = vsel %vm238, %v663, 0
        %666 = vmatpush.msra.mxu0 0.0
        %667 = vmatpush.msra.mxu0 0.0
        %668 = vmatpush.msra.mxu0 0.0
        %669 = vmatpush.msra.mxu0 0.0
        %670 = vmatpush.msra.mxu0 0.0
        %671 = vmatpush.msra.mxu0 0.0
        %672 = vmatpush.msra.mxu0 0.0
        %673 = vmatpush.msra.mxu0 0.0
        %674 = vmatpush.msra.mxu0 0.0
        %675 = vmatpush.msra.mxu0 0.0
        %676 = vmatpush.msra.mxu0 0.0
        %677 = vmatpush.msra.mxu0 0.0
        %678 = vmatpush.msra.mxu0 0.0
        %679 = vmatpush.msra.mxu0 0.0
        %680 = vmatpush.msra.mxu0 0.0
        %681 = vmatpush.msra.mxu0 %v664
        %682 = vmatmul.f32.gmra.mxu0 %v637
        %v683 = vpop.f32.mrf.mxu0
        %v684 = vadd.f32 0.0, %v683
        %685 = vdwg.mxu0
        %687 = vrot.lane.b32.xlu0 %v625, 126
        %v688 = vpop.permute.xlu0 %687
        %v689 = vsel %vm238, %v688, 0
        %691 = vmatpush.msra.mxu0 0.0
        %692 = vmatpush.msra.mxu0 0.0
        %693 = vmatpush.msra.mxu0 0.0
        %694 = vmatpush.msra.mxu0 0.0
        %695 = vmatpush.msra.mxu0 0.0
        %696 = vmatpush.msra.mxu0 0.0
        %697 = vmatpush.msra.mxu0 0.0
        %698 = vmatpush.msra.mxu0 0.0
        %699 = vmatpush.msra.mxu0 0.0
        %700 = vmatpush.msra.mxu0 0.0
        %701 = vmatpush.msra.mxu0 0.0
        %702 = vmatpush.msra.mxu0 0.0
        %703 = vmatpush.msra.mxu0 0.0
        %704 = vmatpush.msra.mxu0 0.0
        %705 = vmatpush.msra.mxu0 0.0
        %706 = vmatpush.msra.mxu0 %v689
        %707 = vmatmul.f32.gmra.mxu0 %v637
        %v708 = vpop.f32.mrf.mxu0
        %v709 = vadd.f32 0.0, %v708
        %710 = vdwg.mxu0
        %712 = vrot.lane.b32.xlu0 %v626, 126
        %v713 = vpop.permute.xlu0 %712
        %v714 = vsel %vm238, %v713, 0
        %716 = vmatpush.msra.mxu0 0.0
        %717 = vmatpush.msra.mxu0 0.0
        %718 = vmatpush.msra.mxu0 0.0
        %719 = vmatpush.msra.mxu0 0.0
        %720 = vmatpush.msra.mxu0 0.0
        %721 = vmatpush.msra.mxu0 0.0
        %722 = vmatpush.msra.mxu0 0.0
        %723 = vmatpush.msra.mxu0 0.0
        %724 = vmatpush.msra.mxu0 0.0
        %725 = vmatpush.msra.mxu0 0.0
        %726 = vmatpush.msra.mxu0 0.0
        %727 = vmatpush.msra.mxu0 0.0
        %728 = vmatpush.msra.mxu0 0.0
        %729 = vmatpush.msra.mxu0 0.0
        %730 = vmatpush.msra.mxu0 0.0
        %731 = vmatpush.msra.mxu0 %v714
        %732 = vmatmul.f32.gmra.mxu0 %v637
        %v733 = vpop.f32.mrf.mxu0
        %v734 = vadd.f32 0.0, %v733
        %735 = vdwg.mxu0
        %737 = vrot.lane.b32.xlu0 %v627, 126
        %v738 = vpop.permute.xlu0 %737
        %v739 = vsel %vm238, %v738, 0
        %741 = vmatpush.msra.mxu0 0.0
        %742 = vmatpush.msra.mxu0 0.0
        %743 = vmatpush.msra.mxu0 0.0
        %744 = vmatpush.msra.mxu0 0.0
        %745 = vmatpush.msra.mxu0 0.0
        %746 = vmatpush.msra.mxu0 0.0
        %747 = vmatpush.msra.mxu0 0.0
        %748 = vmatpush.msra.mxu0 0.0
        %749 = vmatpush.msra.mxu0 0.0
        %750 = vmatpush.msra.mxu0 0.0
        %751 = vmatpush.msra.mxu0 0.0
        %752 = vmatpush.msra.mxu0 0.0
        %753 = vmatpush.msra.mxu0 0.0
        %754 = vmatpush.msra.mxu0 0.0
        %755 = vmatpush.msra.mxu0 0.0
        %756 = vmatpush.msra.mxu0 %v739
        %757 = vmatmul.f32.gmra.mxu0 %v637
        %v758 = vpop.f32.mrf.mxu0
        %v759 = vadd.f32 0.0, %v758
        %760 = vdwg.mxu0
        %762 = vrot.lane.b32.xlu0 %v628, 126
        %v763 = vpop.permute.xlu0 %762
        %v764 = vsel %vm238, %v763, 0
        %766 = vmatpush.msra.mxu0 0.0
        %767 = vmatpush.msra.mxu0 0.0
        %768 = vmatpush.msra.mxu0 0.0
        %769 = vmatpush.msra.mxu0 0.0
        %770 = vmatpush.msra.mxu0 0.0
        %771 = vmatpush.msra.mxu0 0.0
        %772 = vmatpush.msra.mxu0 0.0
        %773 = vmatpush.msra.mxu0 0.0
        %774 = vmatpush.msra.mxu0 0.0
        %775 = vmatpush.msra.mxu0 0.0
        %776 = vmatpush.msra.mxu0 0.0
        %777 = vmatpush.msra.mxu0 0.0
        %778 = vmatpush.msra.mxu0 0.0
        %779 = vmatpush.msra.mxu0 0.0
        %780 = vmatpush.msra.mxu0 0.0
        %781 = vmatpush.msra.mxu0 %v764
        %782 = vmatmul.f32.gmra.mxu0 %v637
        %v783 = vpop.f32.mrf.mxu0
        %v784 = vadd.f32 0.0, %v783
        %785 = vdwg.mxu0
        %787 = vrot.lane.b32.xlu0 %v629, 126
        %v788 = vpop.permute.xlu0 %787
        %v789 = vsel %vm238, %v788, 0
        %791 = vmatpush.msra.mxu0 0.0
        %792 = vmatpush.msra.mxu0 0.0
        %793 = vmatpush.msra.mxu0 0.0
        %794 = vmatpush.msra.mxu0 0.0
        %795 = vmatpush.msra.mxu0 0.0
        %796 = vmatpush.msra.mxu0 0.0
        %797 = vmatpush.msra.mxu0 0.0
        %798 = vmatpush.msra.mxu0 0.0
        %799 = vmatpush.msra.mxu0 0.0
        %800 = vmatpush.msra.mxu0 0.0
        %801 = vmatpush.msra.mxu0 0.0
        %802 = vmatpush.msra.mxu0 0.0
        %803 = vmatpush.msra.mxu0 0.0
        %804 = vmatpush.msra.mxu0 0.0
        %805 = vmatpush.msra.mxu0 0.0
        %806 = vmatpush.msra.mxu0 %v789
        %807 = vmatmul.f32.gmra.mxu0 %v637
        %v808 = vpop.f32.mrf.mxu0
        %v809 = vadd.f32 0.0, %v808
        %810 = vdwg.mxu0
        %812 = vrot.lane.b32.xlu0 %v630, 126
        %v813 = vpop.permute.xlu0 %812
        %v814 = vsel %vm238, %v813, 0
        %816 = vmatpush.msra.mxu0 0.0
        %817 = vmatpush.msra.mxu0 0.0
        %818 = vmatpush.msra.mxu0 0.0
        %819 = vmatpush.msra.mxu0 0.0
        %820 = vmatpush.msra.mxu0 0.0
        %821 = vmatpush.msra.mxu0 0.0
        %822 = vmatpush.msra.mxu0 0.0
        %823 = vmatpush.msra.mxu0 0.0
        %824 = vmatpush.msra.mxu0 0.0
        %825 = vmatpush.msra.mxu0 0.0
        %826 = vmatpush.msra.mxu0 0.0
        %827 = vmatpush.msra.mxu0 0.0
        %828 = vmatpush.msra.mxu0 0.0
        %829 = vmatpush.msra.mxu0 0.0
        %830 = vmatpush.msra.mxu0 0.0
        %831 = vmatpush.msra.mxu0 %v814
        %832 = vmatmul.f32.gmra.mxu0 %v637
        %v833 = vpop.f32.mrf.mxu0
        %v834 = vadd.f32 0.0, %v833
        %835 = vdwg.mxu0
        %v836 = vadd.f32 %v460, %v659
        %v837 = vadd.f32 %v483, %v684
        %v838 = vadd.f32 %v506, %v709
        %v839 = vadd.f32 %v529, %v734
        %v840 = vadd.f32 %v552, %v759
        %v841 = vadd.f32 %v575, %v784
        %v842 = vadd.f32 %v598, %v809
        %v843 = vadd.f32 %v621, %v834
        %v844 = vld [vmem:[%s206] sm:$0xf]
        %v845 = vld [vmem:[%s206 + $0x4] sm:$0xf]
        %v846 = vld [vmem:[%s206 + $0x8] sm:$0xf]
        %v847 = vld [vmem:[%s206 + $0xc] sm:$0xf]
        %v848 = vld [vmem:[%s206 + $0x10] sm:$0xf]
        %v849 = vld [vmem:[%s206 + $0x14] sm:$0xf]
        %v850 = vld [vmem:[%s206 + $0x18] sm:$0xf]
        %v851 = vld [vmem:[%s206 + $0x1c] sm:$0xf]
        %s852 = scalar_lea.vmem %s1, 24
        %v853 = vld [vmem:[%s852] sm:$0xff]
        %855 = vrot.lane.b32.xlu0 %v844, 125
        %v856 = vpop.permute.xlu0 %855
        %v858 = vsel %vm234, %v853, 0
        %v860 = vsel %vm238, %v856, 0
        %862 = vmatpush.msra.mxu0 0.0
        %863 = vmatpush.msra.mxu0 0.0
        %864 = vmatpush.msra.mxu0 0.0
        %865 = vmatpush.msra.mxu0 0.0
        %866 = vmatpush.msra.mxu0 0.0
        %867 = vmatpush.msra.mxu0 0.0
        %868 = vmatpush.msra.mxu0 0.0
        %869 = vmatpush.msra.mxu0 0.0
        %870 = vmatpush.msra.mxu0 0.0
        %871 = vmatpush.msra.mxu0 0.0
        %872 = vmatpush.msra.mxu0 0.0
        %873 = vmatpush.msra.mxu0 0.0
        %874 = vmatpush.msra.mxu0 0.0
        %875 = vmatpush.msra.mxu0 0.0
        %876 = vmatpush.msra.mxu0 0.0
        %877 = vmatpush.msra.mxu0 %v860
        %878 = vmatmul.f32.gmra.mxu0 %v858
        %v879 = vpop.f32.mrf.mxu0
        %v880 = vadd.f32 0.0, %v879
        %881 = vdwg.mxu0
        %883 = vrot.lane.b32.xlu0 %v845, 125
        %v884 = vpop.permute.xlu0 %883
        %v885 = vsel %vm238, %v884, 0
        %887 = vmatpush.msra.mxu0 0.0
        %888 = vmatpush.msra.mxu0 0.0
        %889 = vmatpush.msra.mxu0 0.0
        %890 = vmatpush.msra.mxu0 0.0
        %891 = vmatpush.msra.mxu0 0.0
        %892 = vmatpush.msra.mxu0 0.0
        %893 = vmatpush.msra.mxu0 0.0
        %894 = vmatpush.msra.mxu0 0.0
        %895 = vmatpush.msra.mxu0 0.0
        %896 = vmatpush.msra.mxu0 0.0
        %897 = vmatpush.msra.mxu0 0.0
        %898 = vmatpush.msra.mxu0 0.0
        %899 = vmatpush.msra.mxu0 0.0
        %900 = vmatpush.msra.mxu0 0.0
        %901 = vmatpush.msra.mxu0 0.0
        %902 = vmatpush.msra.mxu0 %v885
        %903 = vmatmul.f32.gmra.mxu0 %v858
        %v904 = vpop.f32.mrf.mxu0
        %v905 = vadd.f32 0.0, %v904
        %906 = vdwg.mxu0
        %908 = vrot.lane.b32.xlu0 %v846, 125
        %v909 = vpop.permute.xlu0 %908
        %v910 = vsel %vm238, %v909, 0
        %912 = vmatpush.msra.mxu0 0.0
        %913 = vmatpush.msra.mxu0 0.0
        %914 = vmatpush.msra.mxu0 0.0
        %915 = vmatpush.msra.mxu0 0.0
        %916 = vmatpush.msra.mxu0 0.0
        %917 = vmatpush.msra.mxu0 0.0
        %918 = vmatpush.msra.mxu0 0.0
        %919 = vmatpush.msra.mxu0 0.0
        %920 = vmatpush.msra.mxu0 0.0
        %921 = vmatpush.msra.mxu0 0.0
        %922 = vmatpush.msra.mxu0 0.0
        %923 = vmatpush.msra.mxu0 0.0
        %924 = vmatpush.msra.mxu0 0.0
        %925 = vmatpush.msra.mxu0 0.0
        %926 = vmatpush.msra.mxu0 0.0
        %927 = vmatpush.msra.mxu0 %v910
        %928 = vmatmul.f32.gmra.mxu0 %v858
        %v929 = vpop.f32.mrf.mxu0
        %v930 = vadd.f32 0.0, %v929
        %931 = vdwg.mxu0
        %933 = vrot.lane.b32.xlu0 %v847, 125
        %v934 = vpop.permute.xlu0 %933
        %v935 = vsel %vm238, %v934, 0
        %937 = vmatpush.msra.mxu0 0.0
        %938 = vmatpush.msra.mxu0 0.0
        %939 = vmatpush.msra.mxu0 0.0
        %940 = vmatpush.msra.mxu0 0.0
        %941 = vmatpush.msra.mxu0 0.0
        %942 = vmatpush.msra.mxu0 0.0
        %943 = vmatpush.msra.mxu0 0.0
        %944 = vmatpush.msra.mxu0 0.0
        %945 = vmatpush.msra.mxu0 0.0
        %946 = vmatpush.msra.mxu0 0.0
        %947 = vmatpush.msra.mxu0 0.0
        %948 = vmatpush.msra.mxu0 0.0
        %949 = vmatpush.msra.mxu0 0.0
        %950 = vmatpush.msra.mxu0 0.0
        %951 = vmatpush.msra.mxu0 0.0
        %952 = vmatpush.msra.mxu0 %v935
        %953 = vmatmul.f32.gmra.mxu0 %v858
        %v954 = vpop.f32.mrf.mxu0
        %v955 = vadd.f32 0.0, %v954
        %956 = vdwg.mxu0
        %958 = vrot.lane.b32.xlu0 %v848, 125
        %v959 = vpop.permute.xlu0 %958
        %v960 = vsel %vm238, %v959, 0
        %962 = vmatpush.msra.mxu0 0.0
        %963 = vmatpush.msra.mxu0 0.0
        %964 = vmatpush.msra.mxu0 0.0
        %965 = vmatpush.msra.mxu0 0.0
        %966 = vmatpush.msra.mxu0 0.0
        %967 = vmatpush.msra.mxu0 0.0
        %968 = vmatpush.msra.mxu0 0.0
        %969 = vmatpush.msra.mxu0 0.0
        %970 = vmatpush.msra.mxu0 0.0
        %971 = vmatpush.msra.mxu0 0.0
        %972 = vmatpush.msra.mxu0 0.0
        %973 = vmatpush.msra.mxu0 0.0
        %974 = vmatpush.msra.mxu0 0.0
        %975 = vmatpush.msra.mxu0 0.0
        %976 = vmatpush.msra.mxu0 0.0
        %977 = vmatpush.msra.mxu0 %v960
        %978 = vmatmul.f32.gmra.mxu0 %v858
        %v979 = vpop.f32.mrf.mxu0
        %v980 = vadd.f32 0.0, %v979
        %981 = vdwg.mxu0
        %983 = vrot.lane.b32.xlu0 %v849, 125
        %v984 = vpop.permute.xlu0 %983
        %v985 = vsel %vm238, %v984, 0
        %987 = vmatpush.msra.mxu0 0.0
        %988 = vmatpush.msra.mxu0 0.0
        %989 = vmatpush.msra.mxu0 0.0
        %990 = vmatpush.msra.mxu0 0.0
        %991 = vmatpush.msra.mxu0 0.0
        %992 = vmatpush.msra.mxu0 0.0
        %993 = vmatpush.msra.mxu0 0.0
        %994 = vmatpush.msra.mxu0 0.0
        %995 = vmatpush.msra.mxu0 0.0
        %996 = vmatpush.msra.mxu0 0.0
        %997 = vmatpush.msra.mxu0 0.0
        %998 = vmatpush.msra.mxu0 0.0
        %999 = vmatpush.msra.mxu0 0.0
        %1000 = vmatpush.msra.mxu0 0.0
        %1001 = vmatpush.msra.mxu0 0.0
        %1002 = vmatpush.msra.mxu0 %v985
        %1003 = vmatmul.f32.gmra.mxu0 %v858
        %v1004 = vpop.f32.mrf.mxu0
        %v1005 = vadd.f32 0.0, %v1004
        %1006 = vdwg.mxu0
        %1008 = vrot.lane.b32.xlu0 %v850, 125
        %v1009 = vpop.permute.xlu0 %1008
        %v1010 = vsel %vm238, %v1009, 0
        %1012 = vmatpush.msra.mxu0 0.0
        %1013 = vmatpush.msra.mxu0 0.0
        %1014 = vmatpush.msra.mxu0 0.0
        %1015 = vmatpush.msra.mxu0 0.0
        %1016 = vmatpush.msra.mxu0 0.0
        %1017 = vmatpush.msra.mxu0 0.0
        %1018 = vmatpush.msra.mxu0 0.0
        %1019 = vmatpush.msra.mxu0 0.0
        %1020 = vmatpush.msra.mxu0 0.0
        %1021 = vmatpush.msra.mxu0 0.0
        %1022 = vmatpush.msra.mxu0 0.0
        %1023 = vmatpush.msra.mxu0 0.0
        %1024 = vmatpush.msra.mxu0 0.0
        %1025 = vmatpush.msra.mxu0 0.0
        %1026 = vmatpush.msra.mxu0 0.0
        %1027 = vmatpush.msra.mxu0 %v1010
        %1028 = vmatmul.f32.gmra.mxu0 %v858
        %v1029 = vpop.f32.mrf.mxu0
        %v1030 = vadd.f32 0.0, %v1029
        %1031 = vdwg.mxu0
        %1033 = vrot.lane.b32.xlu0 %v851, 125
        %v1034 = vpop.permute.xlu0 %1033
        %v1035 = vsel %vm238, %v1034, 0
        %1037 = vmatpush.msra.mxu0 0.0
        %1038 = vmatpush.msra.mxu0 0.0
        %1039 = vmatpush.msra.mxu0 0.0
        %1040 = vmatpush.msra.mxu0 0.0
        %1041 = vmatpush.msra.mxu0 0.0
        %1042 = vmatpush.msra.mxu0 0.0
        %1043 = vmatpush.msra.mxu0 0.0
        %1044 = vmatpush.msra.mxu0 0.0
        %1045 = vmatpush.msra.mxu0 0.0
        %1046 = vmatpush.msra.mxu0 0.0
        %1047 = vmatpush.msra.mxu0 0.0
        %1048 = vmatpush.msra.mxu0 0.0
        %1049 = vmatpush.msra.mxu0 0.0
        %1050 = vmatpush.msra.mxu0 0.0
        %1051 = vmatpush.msra.mxu0 0.0
        %1052 = vmatpush.msra.mxu0 %v1035
        %1053 = vmatmul.f32.gmra.mxu0 %v858
        %v1054 = vpop.f32.mrf.mxu0
        %v1055 = vadd.f32 0.0, %v1054
        %1056 = vdwg.mxu0
        %v1057 = vadd.f32 %v836, %v880
        %v1058 = vadd.f32 %v837, %v905
        %v1059 = vadd.f32 %v838, %v930
        %v1060 = vadd.f32 %v839, %v955
        %v1061 = vadd.f32 %v840, %v980
        %v1062 = vadd.f32 %v841, %v1005
        %v1063 = vadd.f32 %v842, %v1030
        %v1064 = vadd.f32 %v843, %v1055
        %v1065 = vld [vmem:[%s206] sm:$0xf]
        %v1066 = vld [vmem:[%s206 + $0x4] sm:$0xf]
        %v1067 = vld [vmem:[%s206 + $0x8] sm:$0xf]
        %v1068 = vld [vmem:[%s206 + $0xc] sm:$0xf]
        %v1069 = vld [vmem:[%s206 + $0x10] sm:$0xf]
        %v1070 = vld [vmem:[%s206 + $0x14] sm:$0xf]
        %v1071 = vld [vmem:[%s206 + $0x18] sm:$0xf]
        %v1072 = vld [vmem:[%s206 + $0x1c] sm:$0xf]
        %s1073 = scalar_lea.vmem %s1, 32
        %v1074 = vld [vmem:[%s1073] sm:$0xff]
        %1076 = vrot.lane.b32.xlu0 %v1065, 124
        %v1077 = vpop.permute.xlu0 %1076
        %v1079 = vsel %vm234, %v1074, 0
        %v1081 = vsel %vm238, %v1077, 0
        %1083 = vmatpush.msra.mxu0 0.0
        %1084 = vmatpush.msra.mxu0 0.0
        %1085 = vmatpush.msra.mxu0 0.0
        %1086 = vmatpush.msra.mxu0 0.0
        %1087 = vmatpush.msra.mxu0 0.0
        %1088 = vmatpush.msra.mxu0 0.0
        %1089 = vmatpush.msra.mxu0 0.0
        %1090 = vmatpush.msra.mxu0 0.0
        %1091 = vmatpush.msra.mxu0 0.0
        %1092 = vmatpush.msra.mxu0 0.0
        %1093 = vmatpush.msra.mxu0 0.0
        %1094 = vmatpush.msra.mxu0 0.0
        %1095 = vmatpush.msra.mxu0 0.0
        %1096 = vmatpush.msra.mxu0 0.0
        %1097 = vmatpush.msra.mxu0 0.0
        %1098 = vmatpush.msra.mxu0 %v1081
        %1099 = vmatmul.f32.gmra.mxu0 %v1079
        %v1100 = vpop.f32.mrf.mxu0
        %v1101 = vadd.f32 0.0, %v1100
        %1102 = vdwg.mxu0
        %1104 = vrot.lane.b32.xlu0 %v1066, 124
        %v1105 = vpop.permute.xlu0 %1104
        %v1106 = vsel %vm238, %v1105, 0
        %1108 = vmatpush.msra.mxu0 0.0
        %1109 = vmatpush.msra.mxu0 0.0
        %1110 = vmatpush.msra.mxu0 0.0
        %1111 = vmatpush.msra.mxu0 0.0
        %1112 = vmatpush.msra.mxu0 0.0
        %1113 = vmatpush.msra.mxu0 0.0
        %1114 = vmatpush.msra.mxu0 0.0
        %1115 = vmatpush.msra.mxu0 0.0
        %1116 = vmatpush.msra.mxu0 0.0
        %1117 = vmatpush.msra.mxu0 0.0
        %1118 = vmatpush.msra.mxu0 0.0
        %1119 = vmatpush.msra.mxu0 0.0
        %1120 = vmatpush.msra.mxu0 0.0
        %1121 = vmatpush.msra.mxu0 0.0
        %1122 = vmatpush.msra.mxu0 0.0
        %1123 = vmatpush.msra.mxu0 %v1106
        %1124 = vmatmul.f32.gmra.mxu0 %v1079
        %v1125 = vpop.f32.mrf.mxu0
        %v1126 = vadd.f32 0.0, %v1125
        %1127 = vdwg.mxu0
        %1129 = vrot.lane.b32.xlu0 %v1067, 124
        %v1130 = vpop.permute.xlu0 %1129
        %v1131 = vsel %vm238, %v1130, 0
        %1133 = vmatpush.msra.mxu0 0.0
        %1134 = vmatpush.msra.mxu0 0.0
        %1135 = vmatpush.msra.mxu0 0.0
        %1136 = vmatpush.msra.mxu0 0.0
        %1137 = vmatpush.msra.mxu0 0.0
        %1138 = vmatpush.msra.mxu0 0.0
        %1139 = vmatpush.msra.mxu0 0.0
        %1140 = vmatpush.msra.mxu0 0.0
        %1141 = vmatpush.msra.mxu0 0.0
        %1142 = vmatpush.msra.mxu0 0.0
        %1143 = vmatpush.msra.mxu0 0.0
        %1144 = vmatpush.msra.mxu0 0.0
        %1145 = vmatpush.msra.mxu0 0.0
        %1146 = vmatpush.msra.mxu0 0.0
        %1147 = vmatpush.msra.mxu0 0.0
        %1148 = vmatpush.msra.mxu0 %v1131
        %1149 = vmatmul.f32.gmra.mxu0 %v1079
        %v1150 = vpop.f32.mrf.mxu0
        %v1151 = vadd.f32 0.0, %v1150
        %1152 = vdwg.mxu0
        %1154 = vrot.lane.b32.xlu0 %v1068, 124
        %v1155 = vpop.permute.xlu0 %1154
        %v1156 = vsel %vm238, %v1155, 0
        %1158 = vmatpush.msra.mxu0 0.0
        %1159 = vmatpush.msra.mxu0 0.0
        %1160 = vmatpush.msra.mxu0 0.0
        %1161 = vmatpush.msra.mxu0 0.0
        %1162 = vmatpush.msra.mxu0 0.0
        %1163 = vmatpush.msra.mxu0 0.0
        %1164 = vmatpush.msra.mxu0 0.0
        %1165 = vmatpush.msra.mxu0 0.0
        %1166 = vmatpush.msra.mxu0 0.0
        %1167 = vmatpush.msra.mxu0 0.0
        %1168 = vmatpush.msra.mxu0 0.0
        %1169 = vmatpush.msra.mxu0 0.0
        %1170 = vmatpush.msra.mxu0 0.0
        %1171 = vmatpush.msra.mxu0 0.0
        %1172 = vmatpush.msra.mxu0 0.0
        %1173 = vmatpush.msra.mxu0 %v1156
        %1174 = vmatmul.f32.gmra.mxu0 %v1079
        %v1175 = vpop.f32.mrf.mxu0
        %v1176 = vadd.f32 0.0, %v1175
        %1177 = vdwg.mxu0
        %1179 = vrot.lane.b32.xlu0 %v1069, 124
        %v1180 = vpop.permute.xlu0 %1179
        %v1181 = vsel %vm238, %v1180, 0
        %1183 = vmatpush.msra.mxu0 0.0
        %1184 = vmatpush.msra.mxu0 0.0
        %1185 = vmatpush.msra.mxu0 0.0
        %1186 = vmatpush.msra.mxu0 0.0
        %1187 = vmatpush.msra.mxu0 0.0
        %1188 = vmatpush.msra.mxu0 0.0
        %1189 = vmatpush.msra.mxu0 0.0
        %1190 = vmatpush.msra.mxu0 0.0
        %1191 = vmatpush.msra.mxu0 0.0
        %1192 = vmatpush.msra.mxu0 0.0
        %1193 = vmatpush.msra.mxu0 0.0
        %1194 = vmatpush.msra.mxu0 0.0
        %1195 = vmatpush.msra.mxu0 0.0
        %1196 = vmatpush.msra.mxu0 0.0
        %1197 = vmatpush.msra.mxu0 0.0
        %1198 = vmatpush.msra.mxu0 %v1181
        %1199 = vmatmul.f32.gmra.mxu0 %v1079
        %v1200 = vpop.f32.mrf.mxu0
        %v1201 = vadd.f32 0.0, %v1200
        %1202 = vdwg.mxu0
        %1204 = vrot.lane.b32.xlu0 %v1070, 124
        %v1205 = vpop.permute.xlu0 %1204
        %v1206 = vsel %vm238, %v1205, 0
        %1208 = vmatpush.msra.mxu0 0.0
        %1209 = vmatpush.msra.mxu0 0.0
        %1210 = vmatpush.msra.mxu0 0.0
        %1211 = vmatpush.msra.mxu0 0.0
        %1212 = vmatpush.msra.mxu0 0.0
        %1213 = vmatpush.msra.mxu0 0.0
        %1214 = vmatpush.msra.mxu0 0.0
        %1215 = vmatpush.msra.mxu0 0.0
        %1216 = vmatpush.msra.mxu0 0.0
        %1217 = vmatpush.msra.mxu0 0.0
        %1218 = vmatpush.msra.mxu0 0.0
        %1219 = vmatpush.msra.mxu0 0.0
        %1220 = vmatpush.msra.mxu0 0.0
        %1221 = vmatpush.msra.mxu0 0.0
        %1222 = vmatpush.msra.mxu0 0.0
        %1223 = vmatpush.msra.mxu0 %v1206
        %1224 = vmatmul.f32.gmra.mxu0 %v1079
        %v1225 = vpop.f32.mrf.mxu0
        %v1226 = vadd.f32 0.0, %v1225
        %1227 = vdwg.mxu0
        %1229 = vrot.lane.b32.xlu0 %v1071, 124
        %v1230 = vpop.permute.xlu0 %1229
        %v1231 = vsel %vm238, %v1230, 0
        %1233 = vmatpush.msra.mxu0 0.0
        %1234 = vmatpush.msra.mxu0 0.0
        %1235 = vmatpush.msra.mxu0 0.0
        %1236 = vmatpush.msra.mxu0 0.0
        %1237 = vmatpush.msra.mxu0 0.0
        %1238 = vmatpush.msra.mxu0 0.0
        %1239 = vmatpush.msra.mxu0 0.0
        %1240 = vmatpush.msra.mxu0 0.0
        %1241 = vmatpush.msra.mxu0 0.0
        %1242 = vmatpush.msra.mxu0 0.0
        %1243 = vmatpush.msra.mxu0 0.0
        %1244 = vmatpush.msra.mxu0 0.0
        %1245 = vmatpush.msra.mxu0 0.0
        %1246 = vmatpush.msra.mxu0 0.0
        %1247 = vmatpush.msra.mxu0 0.0
        %1248 = vmatpush.msra.mxu0 %v1231
        %1249 = vmatmul.f32.gmra.mxu0 %v1079
        %v1250 = vpop.f32.mrf.mxu0
        %v1251 = vadd.f32 0.0, %v1250
        %1252 = vdwg.mxu0
        %1254 = vrot.lane.b32.xlu0 %v1072, 124
        %v1255 = vpop.permute.xlu0 %1254
        %v1256 = vsel %vm238, %v1255, 0
        %1258 = vmatpush.msra.mxu0 0.0
        %1259 = vmatpush.msra.mxu0 0.0
        %1260 = vmatpush.msra.mxu0 0.0
        %1261 = vmatpush.msra.mxu0 0.0
        %1262 = vmatpush.msra.mxu0 0.0
        %1263 = vmatpush.msra.mxu0 0.0
        %1264 = vmatpush.msra.mxu0 0.0
        %1265 = vmatpush.msra.mxu0 0.0
        %1266 = vmatpush.msra.mxu0 0.0
        %1267 = vmatpush.msra.mxu0 0.0
        %1268 = vmatpush.msra.mxu0 0.0
        %1269 = vmatpush.msra.mxu0 0.0
        %1270 = vmatpush.msra.mxu0 0.0
        %1271 = vmatpush.msra.mxu0 0.0
        %1272 = vmatpush.msra.mxu0 0.0
        %1273 = vmatpush.msra.mxu0 %v1256
        %1274 = vmatmul.f32.gmra.mxu0 %v1079
        %v1275 = vpop.f32.mrf.mxu0
        %v1276 = vadd.f32 0.0, %v1275
        %1277 = vdwg.mxu0
        %v1278 = vadd.f32 %v1057, %v1101
        %v1279 = vadd.f32 %v1058, %v1126
        %v1280 = vadd.f32 %v1059, %v1151
        %v1281 = vadd.f32 %v1060, %v1176
        %v1282 = vadd.f32 %v1061, %v1201
        %v1283 = vadd.f32 %v1062, %v1226
        %v1284 = vadd.f32 %v1063, %v1251
        %v1285 = vadd.f32 %v1064, %v1276
        %v1286 = vld [vmem:[%s2] sm:$0xff]
        %1288 = vset.pattern.permute.xlu0 0
        %1289 = vperm.xlu0 %1288, %v1286
        %v1290 = vpop.permute.xlu0 %1289
        %v1292 = vadd.f32 %v1278, %v1290
        %v1293 = vadd.f32 %v1279, %v1290
        %v1294 = vadd.f32 %v1280, %v1290
        %v1295 = vadd.f32 %v1281, %v1290
        %v1296 = vadd.f32 %v1282, %v1290
        %v1297 = vadd.f32 %v1283, %v1290
        %v1298 = vadd.f32 %v1284, %v1290
        %v1299 = vadd.f32 %v1285, %v1290
        %vm1300 = vcmask 97280
        %v1301 = vsel %vm1300, %v1292, -inf
        %1302 = vmax.xlane.f32.xlu0 %v1301
        %v1303 = vpop.xlane.xlu0 %1302
        %v1304 = vsel %vm1300, %v1293, -inf
        %1305 = vmax.xlane.f32.xlu0 %v1304
        %v1306 = vpop.xlane.xlu0 %1305
        %v1307 = vsel %vm1300, %v1294, -inf
        %1308 = vmax.xlane.f32.xlu0 %v1307
        %v1309 = vpop.xlane.xlu0 %1308
        %v1310 = vsel %vm1300, %v1295, -inf
        %1311 = vmax.xlane.f32.xlu0 %v1310
        %v1312 = vpop.xlane.xlu0 %1311
        %v1313 = vsel %vm1300, %v1296, -inf
        %1314 = vmax.xlane.f32.xlu0 %v1313
        %v1315 = vpop.xlane.xlu0 %1314
        %v1316 = vsel %vm1300, %v1297, -inf
        %1317 = vmax.xlane.f32.xlu0 %v1316
        %v1318 = vpop.xlane.xlu0 %1317
        %v1319 = vsel %vm1300, %v1298, -inf
        %1320 = vmax.xlane.f32.xlu0 %v1319
        %v1321 = vpop.xlane.xlu0 %1320
        %v1322 = vsel %vm1300, %v1299, -inf
        %1323 = vmax.xlane.f32.xlu0 %v1322
        %v1324 = vpop.xlane.xlu0 %1323
        %v1325 = vrot.slane %v1303, 4
        %v1326 = vmax.f32 %v1303, %v1325
        %v1327 = vrot.slane %v1326, 2
        %v1328 = vmax.f32 %v1326, %v1327
        %v1329 = vrot.slane %v1328, 1
        %v1330 = vmax.f32 %v1328, %v1329
        %v1331 = vrot.slane %v1306, 4
        %v1332 = vmax.f32 %v1306, %v1331
        %v1333 = vrot.slane %v1332, 2
        %v1334 = vmax.f32 %v1332, %v1333
        %v1335 = vrot.slane %v1334, 1
        %v1336 = vmax.f32 %v1334, %v1335
        %v1337 = vrot.slane %v1309, 4
        %v1338 = vmax.f32 %v1309, %v1337
        %v1339 = vrot.slane %v1338, 2
        %v1340 = vmax.f32 %v1338, %v1339
        %v1341 = vrot.slane %v1340, 1
        %v1342 = vmax.f32 %v1340, %v1341
        %v1343 = vrot.slane %v1312, 4
        %v1344 = vmax.f32 %v1312, %v1343
        %v1345 = vrot.slane %v1344, 2
        %v1346 = vmax.f32 %v1344, %v1345
        %v1347 = vrot.slane %v1346, 1
        %v1348 = vmax.f32 %v1346, %v1347
        %v1349 = vrot.slane %v1315, 4
        %v1350 = vmax.f32 %v1315, %v1349
        %v1351 = vrot.slane %v1350, 2
        %v1352 = vmax.f32 %v1350, %v1351
        %v1353 = vrot.slane %v1352, 1
        %v1354 = vmax.f32 %v1352, %v1353
        %v1355 = vrot.slane %v1318, 4
        %v1356 = vmax.f32 %v1318, %v1355
        %v1357 = vrot.slane %v1356, 2
        %v1358 = vmax.f32 %v1356, %v1357
        %v1359 = vrot.slane %v1358, 1
        %v1360 = vmax.f32 %v1358, %v1359
        %v1361 = vrot.slane %v1321, 4
        %v1362 = vmax.f32 %v1321, %v1361
        %v1363 = vrot.slane %v1362, 2
        %v1364 = vmax.f32 %v1362, %v1363
        %v1365 = vrot.slane %v1364, 1
        %v1366 = vmax.f32 %v1364, %v1365
        %v1367 = vrot.slane %v1324, 4
        %v1368 = vmax.f32 %v1324, %v1367
        %v1369 = vrot.slane %v1368, 2
        %v1370 = vmax.f32 %v1368, %v1369
        %v1371 = vrot.slane %v1370, 1
        %v1372 = vmax.f32 %v1370, %v1371
        %v1373 = vsub.f32 %v1292, %v1330
        %v1374 = vsub.f32 %v1293, %v1336
        %v1375 = vsub.f32 %v1294, %v1342
        %v1376 = vsub.f32 %v1295, %v1348
        %v1377 = vsub.f32 %v1296, %v1354
        %v1378 = vsub.f32 %v1297, %v1360
        %v1379 = vsub.f32 %v1298, %v1366
        %v1380 = vsub.f32 %v1299, %v1372
        %v1381 = vmul.f32 %v1373, 1.442695
        %v1382 = vpow.pop %v1381
        %v1383 = vmul.f32 %v1374, 1.442695
        %v1384 = vpow.pop %v1383
        %v1385 = vmul.f32 %v1375, 1.442695
        %v1386 = vpow.pop %v1385
        %v1387 = vmul.f32 %v1376, 1.442695
        %v1388 = vpow.pop %v1387
        %v1389 = vmul.f32 %v1377, 1.442695
        %v1390 = vpow.pop %v1389
        %v1391 = vmul.f32 %v1378, 1.442695
        %v1392 = vpow.pop %v1391
        %v1393 = vmul.f32 %v1379, 1.442695
        %v1394 = vpow.pop %v1393
        %v1395 = vmul.f32 %v1380, 1.442695
        %v1396 = vpow.pop %v1395
        %v1397 = vsel %vm1300, %v1382, 0.0
        %1398 = vadd.xlane.f32.xlu0 %v1397
        %v1399 = vpop.xlane.xlu0 %1398
        %v1400 = vsel %vm1300, %v1384, 0.0
        %1401 = vadd.xlane.f32.xlu0 %v1400
        %v1402 = vpop.xlane.xlu0 %1401
        %v1403 = vsel %vm1300, %v1386, 0.0
        %1404 = vadd.xlane.f32.xlu0 %v1403
        %v1405 = vpop.xlane.xlu0 %1404
        %v1406 = vsel %vm1300, %v1388, 0.0
        %1407 = vadd.xlane.f32.xlu0 %v1406
        %v1408 = vpop.xlane.xlu0 %1407
        %v1409 = vsel %vm1300, %v1390, 0.0
        %1410 = vadd.xlane.f32.xlu0 %v1409
        %v1411 = vpop.xlane.xlu0 %1410
        %v1412 = vsel %vm1300, %v1392, 0.0
        %1413 = vadd.xlane.f32.xlu0 %v1412
        %v1414 = vpop.xlane.xlu0 %1413
        %v1415 = vsel %vm1300, %v1394, 0.0
        %1416 = vadd.xlane.f32.xlu0 %v1415
        %v1417 = vpop.xlane.xlu0 %1416
        %v1418 = vsel %vm1300, %v1396, 0.0
        %1419 = vadd.xlane.f32.xlu0 %v1418
        %v1420 = vpop.xlane.xlu0 %1419
        %v1421 = vrot.slane %v1399, 4
        %v1422 = vadd.f32 %v1399, %v1421
        %v1423 = vrot.slane %v1422, 2
        %v1424 = vadd.f32 %v1422, %v1423
        %v1425 = vrot.slane %v1424, 1
        %v1426 = vadd.f32 %v1424, %v1425
        %v1427 = vrot.slane %v1402, 4
        %v1428 = vadd.f32 %v1402, %v1427
        %v1429 = vrot.slane %v1428, 2
        %v1430 = vadd.f32 %v1428, %v1429
        %v1431 = vrot.slane %v1430, 1
        %v1432 = vadd.f32 %v1430, %v1431
        %v1433 = vrot.slane %v1405, 4
        %v1434 = vadd.f32 %v1405, %v1433
        %v1435 = vrot.slane %v1434, 2
        %v1436 = vadd.f32 %v1434, %v1435
        %v1437 = vrot.slane %v1436, 1
        %v1438 = vadd.f32 %v1436, %v1437
        %v1439 = vrot.slane %v1408, 4
        %v1440 = vadd.f32 %v1408, %v1439
        %v1441 = vrot.slane %v1440, 2
        %v1442 = vadd.f32 %v1440, %v1441
        %v1443 = vrot.slane %v1442, 1
        %v1444 = vadd.f32 %v1442, %v1443
        %v1445 = vrot.slane %v1411, 4
        %v1446 = vadd.f32 %v1411, %v1445
        %v1447 = vrot.slane %v1446, 2
        %v1448 = vadd.f32 %v1446, %v1447
        %v1449 = vrot.slane %v1448, 1
        %v1450 = vadd.f32 %v1448, %v1449
        %v1451 = vrot.slane %v1414, 4
        %v1452 = vadd.f32 %v1414, %v1451
        %v1453 = vrot.slane %v1452, 2
        %v1454 = vadd.f32 %v1452, %v1453
        %v1455 = vrot.slane %v1454, 1
        %v1456 = vadd.f32 %v1454, %v1455
        %v1457 = vrot.slane %v1417, 4
        %v1458 = vadd.f32 %v1417, %v1457
        %v1459 = vrot.slane %v1458, 2
        %v1460 = vadd.f32 %v1458, %v1459
        %v1461 = vrot.slane %v1460, 1
        %v1462 = vadd.f32 %v1460, %v1461
        %v1463 = vrot.slane %v1420, 4
        %v1464 = vadd.f32 %v1420, %v1463
        %v1465 = vrot.slane %v1464, 2
        %v1466 = vadd.f32 %v1464, %v1465
        %v1467 = vrot.slane %v1466, 1
        %v1468 = vadd.f32 %v1466, %v1467
        %v1469 = vlog2.pop %v1426
        %v1470 = vmul.f32 %v1469, 0.6931472
        %v1471 = vlog2.pop %v1432
        %v1472 = vmul.f32 %v1471, 0.6931472
        %v1473 = vlog2.pop %v1438
        %v1474 = vmul.f32 %v1473, 0.6931472
        %v1475 = vlog2.pop %v1444
        %v1476 = vmul.f32 %v1475, 0.6931472
        %v1477 = vlog2.pop %v1450
        %v1478 = vmul.f32 %v1477, 0.6931472
        %v1479 = vlog2.pop %v1456
        %v1480 = vmul.f32 %v1479, 0.6931472
        %v1481 = vlog2.pop %v1462
        %v1482 = vmul.f32 %v1481, 0.6931472
        %v1483 = vlog2.pop %v1468
        %v1484 = vmul.f32 %v1483, 0.6931472
        %v1485 = vadd.f32 %v1470, %v1330
        %v1486 = vadd.f32 %v1472, %v1336
        %v1487 = vadd.f32 %v1474, %v1342
        %v1488 = vadd.f32 %v1476, %v1348
        %v1489 = vadd.f32 %v1478, %v1354
        %v1490 = vadd.f32 %v1480, %v1360
        %v1491 = vadd.f32 %v1482, %v1366
        %v1492 = vadd.f32 %v1484, %v1372
        %s1493 = sld [smem:[#allocation2]]
        %s1494 = sld [smem:[#allocation2 + $0x1]]
        %v1495 = vstv %s1493
        %v1496 = vmul.f32 %v1485, %v1495
        %v1497 = vmul.f32 %v1486, %v1495
        %v1498 = vmul.f32 %v1487, %v1495
        %v1499 = vmul.f32 %v1488, %v1495
        %v1500 = vmul.f32 %v1489, %v1495
        %v1501 = vmul.f32 %v1490, %v1495
        %v1502 = vmul.f32 %v1491, %v1495
        %v1503 = vmul.f32 %v1492, %v1495
        %v1504 = vstv %s1494
        %v1505 = vadd.f32 %v1496, %v1504
        %v1506 = vadd.f32 %v1497, %v1504
        %v1507 = vadd.f32 %v1498, %v1504
        %v1508 = vadd.f32 %v1499, %v1504
        %v1509 = vadd.f32 %v1500, %v1504
        %v1510 = vadd.f32 %v1501, %v1504
        %v1511 = vadd.f32 %v1502, %v1504
        %v1512 = vadd.f32 %v1503, %v1504
        %vm1521 = vcmask 1041409
        %v1522 = vsel %vm1521, %v1506, %v1505
        %vm1523 = vcmask 1042434
        %v1524 = vsel %vm1523, %v1507, %v1522
        %vm1525 = vcmask 1043459
        %v1526 = vsel %vm1525, %v1508, %v1524
        %vm1527 = vcmask 1044484
        %v1528 = vsel %vm1527, %v1509, %v1526
        %vm1529 = vcmask 1045509
        %v1530 = vsel %vm1529, %v1510, %v1528
        %vm1531 = vcmask 1046534
        %v1532 = vsel %vm1531, %v1511, %v1530
        %vm1533 = vcmask 1047559
        %v1534 = vsel %vm1533, %v1512, %v1532
        %vm1536 = vcmask 7168
        %1537 = vst.msk [vmem:[%s211] sm:$0xff] %vm1536, %v1534
        %p1538 = scmp.lt.s32.totalorder %s16, 1
        %s1539 = scalar_select %p1538, %s16, 1
        %s1540 = smul.addr %s1539, 8
        %s1541 = scalar_lea.vmem %s4, %s1540
        // Predicated region
        $region41: #{tpu_custom_call.1} parent=35 // pred_check
          %p1542 = pneg %p123
        $region42: #{tpu_custom_call.1} parent=35 // pred_check_branch
          %1544 = sbr.rel (%p1542) target = $region44
        $region43: #{tpu_custom_call.1} parent=35 // pred_region
          _
        $region44: #{tpu_custom_call.1} parent=35 // pred_fallthru
          _
      $region36: #{tpu_custom_call.1} parent=5 // pred_fallthru
        _
      %p1545 = scmp.le.s32.totalorder 2, %s11
      // Predicated region
      $region45: #{tpu_custom_call.1} parent=5 // pred_check
        %p1546 = pneg %p1545
      $region46: #{tpu_custom_call.1} parent=5 // pred_check_branch
        %1548 = sbr.rel (%p1546) target = $region48
      $region47: #{tpu_custom_call.1} parent=5 // pred_region
        %s1549 = ssub.s32 %s11, 2
        // Predicated region
        $region49: #{tpu_custom_call.1} parent=47 // pred_check
          %p1550 = pneg %p129
        $region50: #{tpu_custom_call.1} parent=47 // pred_check_branch
          %1552 = sbr.rel (%p1550) target = $region52
        $region51: #{tpu_custom_call.1} parent=47 // pred_region
          %p1553 = scmp.lt.s32.totalorder %s17, 1
          %s1554 = scalar_select %p1553, %s17, 1
          %s1555 = smul.addr %s1554, 8
          %s1556 = scalar_lea.vmem %s4, %s1555
        $region52: #{tpu_custom_call.1} parent=47 // pred_fallthru
          _
      $region48: #{tpu_custom_call.1} parent=5 // pred_fallthru
        _
    $region6: #{tpu_custom_call.1} parent=1 // loop_footer
      %s15 = sadd.s32 1, %s11
    $region7: #{tpu_custom_call.1} parent=1 // loop_footer_branch
      %10 = sbr.rel target = $region3
    $region8: #{tpu_custom_call.1} parent=1 // loop_exit
      _
    %1557 = vsyncpa [#allocation3], 1
    %s1558 = scalar_lea.sflag [#allocation3], 1
    %1559 = vsyncpa %s1558, 1

</llo_original>
